<compile_context>
chip_gen: v5e
topology: v5e:2x2
jax: 0.10.0
libtpu: 0.0.40
codegen_flags: <defaults>
</compile_context>

<pallas_src>
import math
from functools import partial

import jax
import jax.numpy as jnp
from jax.experimental import pallas as pl
from jax.experimental.pallas import tpu as pltpu


def _round_up(x, m):
    return (x + m - 1) // m * m


# ----------------------------------------------------------------------------
# Fused kernel (small/medium graphs): everything resident in VMEM, all hops in
# one pallas_call.  M = D^{-1} A (bf16); Lap(x) = x - M @ x.
# ----------------------------------------------------------------------------
def cheb_fused_kernel(data_ref, w_ref, b_ref, m_ref, out_ref, *, depth):
    out2_f32 = jnp.dot(data_ref[...], w_ref[...],
                       preferred_element_type=jnp.float32) + b_ref[...]
    out2 = out2_f32.astype(jnp.bfloat16)

    def lap(x_bf16):                     # Lap(x) = x - (D^-1 A) @ x
        return (x_bf16.astype(jnp.float32)
                - jnp.dot(m_ref[...], x_bf16, preferred_element_type=jnp.float32))

    out1_f32 = lap(out2)
    acc = out2.astype(jnp.float32) + out1_f32
    out1 = out1_f32.astype(jnp.bfloat16)
    for _ in range(depth):               # depth is a static python int
        new_f32 = 2.0 * lap(out1) - out2.astype(jnp.float32)
        acc = acc + new_f32
        out2 = out1
        out1 = new_f32.astype(jnp.bfloat16)
    out_ref[...] = jnp.maximum(acc, 0.0)


# ----------------------------------------------------------------------------
# Tiled path kernels (large graphs)
# ----------------------------------------------------------------------------
def linear_kernel(x_ref, w_ref, b_ref, o_ref):
    o_ref[...] = (jnp.dot(x_ref[...], w_ref[...],
                          preferred_element_type=jnp.float32)
                  + b_ref[...]).astype(o_ref.dtype)


def cheb_hop_kernel(*refs, alpha, beta, apply_relu, has_y, has_acc, tm, tk):
    refs = list(refs)
    m_ref = refs.pop(0)                       # (tm, tk) bf16, streamed
    x_ref = refs.pop(0)                       # (n_pad, f_pad) bf16, VMEM-resident
    y_ref = refs.pop(0) if has_y else None    # (tm, f_pad) bf16
    acc_in_ref = refs.pop(0) if has_acc else None   # (tm, f_pad) f32
    iter_ref, acc_out_ref, mm_ref = refs

    i = pl.program_id(0)
    k = pl.program_id(1)

    @pl.when(k == 0)
    def _():
        mm_ref[...] = jnp.zeros_like(mm_ref)

    # One MXU matmul per grid step: (tm, tk) bf16 tile of M times a tk-row
    # slice of the resident operand; accumulate in f32 scratch.
    x_blk = x_ref[pl.ds(pl.multiple_of(k * tk, tk), tk), :]
    mm_ref[...] += jnp.dot(m_ref[...], x_blk, preferred_element_type=jnp.float32)

    @pl.when(k == pl.num_programs(1) - 1)
    def _():
        x_rows = x_ref[pl.ds(pl.multiple_of(i * tm, tm), tm), :].astype(jnp.float32)
        lap_x = x_rows - mm_ref[...]                 # Lap(x) = x - (D^-1 A) x
        new_iter = lap_x if alpha == 1.0 else alpha * lap_x
        if beta != 0.0:
            new_iter = new_iter + beta * y_ref[...].astype(jnp.float32)
        acc_base = acc_in_ref[...].astype(jnp.float32) if has_acc else x_rows
        new_acc = acc_base + new_iter
        if apply_relu:
            new_acc = jnp.maximum(new_acc, 0.0)
        iter_ref[...] = new_iter.astype(iter_ref.dtype)      # bf16 iterate
        acc_out_ref[...] = new_acc.astype(acc_out_ref.dtype)  # f32 running sum


def _hop(m_bf16, x_bf16, y_bf16=None, acc_in=None, *,
         alpha, beta, apply_relu, tm, tk):
    n_pad, f_pad = x_bf16.shape
    has_y = y_bf16 is not None
    has_acc = acc_in is not None
    grid = (n_pad // tm, n_pad // tk)

    in_specs = [
        pl.BlockSpec((tm, tk), lambda i, k: (i, k)),        # M tile (streamed)
        pl.BlockSpec((n_pad, f_pad), lambda i, k: (0, 0)),  # x resident in VMEM
    ]
    inputs = [m_bf16, x_bf16]
    io_aliases = {}
    if has_y:
        io_aliases[len(inputs)] = 0        # y buffer reused for the new iterate
        in_specs.append(pl.BlockSpec((tm, f_pad), lambda i, k: (i, 0)))
        inputs.append(y_bf16)
    if has_acc:
        if acc_in.dtype == jnp.float32:
            io_aliases[len(inputs)] = 1    # running sum updated in place
        in_specs.append(pl.BlockSpec((tm, f_pad), lambda i, k: (i, 0)))
        inputs.append(acc_in)

    flops = 2 * n_pad * n_pad * f_pad + 6 * n_pad * f_pad
    bytes_accessed = (n_pad * n_pad * 2            # M stream (only HBM stream)
                      + n_pad * f_pad * 2          # resident x, read once
                      + (n_pad * f_pad * 2 if has_y else 0)
                      + (n_pad * f_pad * 4 if has_acc else 0)
                      + n_pad * f_pad * (2 + 4))   # iterate (bf16) + acc (f32) out

    return pl.pallas_call(
        partial(cheb_hop_kernel, alpha=alpha, beta=beta, apply_relu=apply_relu,
                has_y=has_y, has_acc=has_acc, tm=tm, tk=tk),
        out_shape=(jax.ShapeDtypeStruct((n_pad, f_pad), jnp.bfloat16),  # new iterate
                   jax.ShapeDtypeStruct((n_pad, f_pad), jnp.float32)),  # running sum
        grid_spec=pltpu.PrefetchScalarGridSpec(
            num_scalar_prefetch=0,
            grid=grid,
            in_specs=in_specs,
            out_specs=[
                pl.BlockSpec((tm, f_pad), lambda i, k: (i, 0)),
                pl.BlockSpec((tm, f_pad), lambda i, k: (i, 0)),
            ],
            scratch_shapes=[pltpu.VMEM((tm, f_pad), jnp.float32)],
        ),
        compiler_params=pltpu.CompilerParams(
            dimension_semantics=("parallel", "arbitrary")),
        cost_estimate=pl.CostEstimate(flops=flops, transcendentals=0,
                                      bytes_accessed=bytes_accessed),
        input_output_aliases=io_aliases,
    )(*inputs)


# ----------------------------------------------------------------------------
# Wrapper
# ----------------------------------------------------------------------------
def chebyshev_forward(data, weight, bias, adj, *, depth=1, tm=256, tk=512,
                      force_path=None):
    """data: (N, in_size), weight: (in_size, out_size), bias: (out_size,),
    adj: (N, N) dense adjacency (structure). force_path in {None,'fused','tiled'}."""
    n, in_size = data.shape
    out_size = weight.shape[1]
    f_pad = _round_up(out_size, 128)                 # lane-dense feature dim

    # Row-normalized adjacency M = D^{-1} A (no eye/Laplacian matrix is built).
    deg = jnp.sum(adj, axis=-1, keepdims=True)
    inv_deg = jnp.where(deg > 0, 1.0 / deg, 0.0)
    norm_adj = (inv_deg * adj).astype(jnp.bfloat16)

    # Choose the fused (L-resident) path when it fits the conservative default
    # scoped VMEM limit (16 MiB on v5e) with headroom; otherwise tile per hop.
    n_fused = _round_up(n, 256)
    fused_vmem = (n_fused * n_fused * 2
                  + n_fused * (in_size + 5 * f_pad) * 4
                  + in_size * f_pad * 4 + f_pad * 4)
    use_fused = (fused_vmem <= 12 * 1024 * 1024) if force_path is None \
        else (force_path == "fused")

    w_p = jnp.pad(weight.astype(jnp.float32), ((0, 0), (0, f_pad - out_size)))
    b_p = jnp.pad(bias.astype(jnp.float32),
                  ((0, f_pad - out_size),)).reshape(1, f_pad)

    if use_fused:
        n_pad = n_fused
        m_p = jnp.pad(norm_adj, ((0, n_pad - n), (0, n_pad - n)))
        data_p = jnp.pad(data.astype(jnp.float32), ((0, n_pad - n), (0, 0)))
        out = pl.pallas_call(
            partial(cheb_fused_kernel, depth=depth),
            out_shape=jax.ShapeDtypeStruct((n_pad, f_pad), jnp.float32),
            in_specs=[pl.BlockSpec(memory_space=pltpu.MemorySpace.VMEM)] * 4,
            out_specs=pl.BlockSpec(memory_space=pltpu.MemorySpace.VMEM),
            cost_estimate=pl.CostEstimate(
                flops=2 * n_pad * in_size * f_pad
                + (depth + 1) * 2 * n_pad * n_pad * f_pad,
                transcendentals=0,
                bytes_accessed=n_pad * n_pad * 2
                + n_pad * (in_size + f_pad) * 4),
        )(data_p, w_p, b_p, m_p)
        return out[:n, :out_size]

    # ------------------------------- tiled path -----------------------------
    n_pad = _round_up(n, math.lcm(tm, tk))
    m_p = jnp.pad(norm_adj, ((0, n_pad - n), (0, n_pad - n)))
    data_p = jnp.pad(data.astype(jnp.float32), ((0, n_pad - n), (0, 0)))

    # out_2 = Linear(data), emitted in bf16 (the hop matmul operand dtype).
    out2 = pl.pallas_call(
        linear_kernel,
        out_shape=jax.ShapeDtypeStruct((n_pad, f_pad), jnp.bfloat16),
        grid_spec=pltpu.PrefetchScalarGridSpec(
            num_scalar_prefetch=0,
            grid=(n_pad // tm,),
            in_specs=[
                pl.BlockSpec((tm, in_size), lambda i: (i, 0)),
                pl.BlockSpec((in_size, f_pad), lambda i: (0, 0)),
                pl.BlockSpec((1, f_pad), lambda i: (0, 0)),
            ],
            out_specs=pl.BlockSpec((tm, f_pad), lambda i: (i, 0)),
        ),
        compiler_params=pltpu.CompilerParams(dimension_semantics=("parallel",)),
        cost_estimate=pl.CostEstimate(
            flops=2 * n_pad * in_size * f_pad, transcendentals=0,
            bytes_accessed=n_pad * in_size * 4 + in_size * f_pad * 4
            + n_pad * f_pad * 2),
    )(data_p, w_p, b_p)

    # First hop: out_1 = Lap(out_2); acc = out_2 + out_1.  y and acc_in are both
    # out_2, which is already the VMEM-resident x operand, so no extra inputs.
    out1, acc = _hop(m_p, out2, alpha=1.0, beta=0.0,
                     apply_relu=(depth == 0), tm=tm, tk=tk)

    # Chebyshev recurrence: out_1' = 2*Lap(out_1) - out_2; acc += out_1'.
    for d in range(depth):
        out1_new, acc = _hop(m_p, out1, y_bf16=out2, acc_in=acc,
                             alpha=2.0, beta=-1.0,
                             apply_relu=(d == depth - 1), tm=tm, tk=tk)
        out2 = out1
        out1 = out1_new

    return acc[:n, :out_size]


# ----------------------------------------------------------------------------
# Pure-JAX references (mirror the PyTorch module; `mixed` mirrors the kernel's
# bf16-operand / f32-accumulate precision model exactly)
# ----------------------------------------------------------------------------
def chebyshev_reference(data, weight, bias, adj, *, depth=1, mixed=False):
    deg = jnp.sum(adj, axis=-1, keepdims=True)
    inv_deg = jnp.where(deg > 0, 1.0 / deg, 0.0)
    norm_adj = inv_deg * adj
    out2_f = jnp.dot(data, weight, precision=jax.lax.Precision.HIGHEST) + bias

    if mixed:
        m_bf = norm_adj.astype(jnp.bfloat16)

        def lap(x_bf):
            return (x_bf.astype(jnp.float32)
                    - jnp.dot(m_bf, x_bf, preferred_element_type=jnp.float32))

        out2 = out2_f.astype(jnp.bfloat16)
        out1_f = lap(out2)
        acc = out2.astype(jnp.float32) + out1_f
        out1 = out1_f.astype(jnp.bfloat16)
        for _ in range(depth):
            new_f = 2.0 * lap(out1) - out2.astype(jnp.float32)
            acc = acc + new_f
            out2 = out1
            out1 = new_f.astype(jnp.bfloat16)
        return jnp.maximum(acc, 0.0)

    def lap(x):
        return x - jnp.dot(norm_adj, x, precision=jax.lax.Precision.HIGHEST)

    out2 = out2_f
    out1 = lap(out2)
    out = out1 + out2
    for _ in range(depth):
        tmp = out1
        out1 = 2.0 * lap(out1) - out2
        out2 = tmp
        out = out + out1
    return jnp.maximum(out, 0.0)


if __name__ == "__main__":
    key = jax.random.PRNGKey(0)
    k_data, k_adj, k_w, k_b = jax.random.split(key, 4)

    n_nodes, in_size, out_size, depth = 256, 8, 32, 2

    data = jax.random.normal(k_data, (n_nodes, in_size), dtype=jnp.float32)

    # Deterministic random adjacency, no self loops (dense `structure`).
    adj = (jax.random.uniform(k_adj, (n_nodes, n_nodes)) < 0.1).astype(jnp.float32)
    adj = adj * (1.0 - jnp.eye(n_nodes, dtype=jnp.float32))

    # nn.Linear-style deterministic init (uniform in +-1/sqrt(in_size)).
    bound = 1.0 / (in_size ** 0.5)
    weight = jax.random.uniform(k_w, (in_size, out_size),
                                minval=-bound, maxval=bound, dtype=jnp.float32)
    bias = jax.random.uniform(k_b, (out_size,),
                              minval=-bound, maxval=bound, dtype=jnp.float32)

    ref_mixed = chebyshev_reference(data, weight, bias, adj, depth=depth, mixed=True)
    ref_f32 = chebyshev_reference(data, weight, bias, adj, depth=depth, mixed=False)

    fused_fn = jax.jit(partial(chebyshev_forward, depth=depth, force_path="fused"))
    tiled_fn = jax.jit(partial(chebyshev_forward, depth=depth, tm=256, tk=512,
                               force_path="tiled"))

    for name, fn in (("fused", fused_fn), ("tiled", tiled_fn)):
        out = jax.block_until_ready(fn(data, weight, bias, adj))
        assert out.shape == (n_nodes, out_size), (name, out.shape)
        err_mixed = float(jnp.max(jnp.abs(out - ref_mixed)))
        err_f32 = float(jnp.max(jnp.abs(out - ref_f32)))
        # Tight check vs the precision-matched (bf16-operand) reference.
        assert jnp.allclose(out, ref_mixed, atol=2e-2, rtol=2e-2), (name, err_mixed)
        # Semantic check vs the full-f32 reference (bf16 operands -> looser).
        assert jnp.allclose(out, ref_f32, atol=6e-2, rtol=6e-2), (name, err_f32)

    print("KERNEL_OK")
</pallas_src>

<mosaic_0001>
module attributes {stable_mosaic.version = 11 : i64} {
  func.func @cheb_fused_kernel(%arg0: memref<256x8xf32, #tpu.memory_space<vmem>>, %arg1: memref<8x128xf32, #tpu.memory_space<vmem>>, %arg2: memref<1x128xf32, #tpu.memory_space<vmem>>, %arg3: memref<256x256xbf16, #tpu.memory_space<vmem>>, %arg4: memref<256x128xf32, #tpu.memory_space<vmem>>) attributes {dimension_semantics = [], scalar_prefetch = 0 : i64, scratch_operands = 0 : i64, tpu.core_type = #tpu.core_type<tc>} {
    %c0 = arith.constant 0 : index
    %c0_0 = arith.constant 0 : index
    %0 = vector.load %arg0[%c0, %c0_0] : memref<256x8xf32, #tpu.memory_space<vmem>>, vector<256x8xf32>
    %c0_1 = arith.constant 0 : index
    %c0_2 = arith.constant 0 : index
    %1 = vector.load %arg1[%c0_1, %c0_2] : memref<8x128xf32, #tpu.memory_space<vmem>>, vector<8x128xf32>
    %cst = arith.constant dense<0.000000e+00> : vector<256x128xf32>
    %2 = tpu.matmul %0, %1, %cst {dimension_numbers = #tpu.dot_dimension_numbers<[1], [0], [0], [1], [0, 0, 1, 1], [], []>} : vector<256x8xf32>, vector<8x128xf32>, vector<256x128xf32> -> vector<256x128xf32>
    %c0_3 = arith.constant 0 : index
    %c0_4 = arith.constant 0 : index
    %3 = vector.load %arg2[%c0_3, %c0_4] : memref<1x128xf32, #tpu.memory_space<vmem>>, vector<1x128xf32>
    %4 = vector.broadcast %3 : vector<1x128xf32> to vector<256x128xf32>
    %5 = arith.addf %2, %4 : vector<256x128xf32>
    %6 = arith.truncf %5 : vector<256x128xf32> to vector<256x128xbf16>
    %7 = arith.extf %6 : vector<256x128xbf16> to vector<256x128xf32>
    %c0_5 = arith.constant 0 : index
    %c0_6 = arith.constant 0 : index
    %8 = vector.load %arg3[%c0_5, %c0_6] : memref<256x256xbf16, #tpu.memory_space<vmem>>, vector<256x256xbf16>
    %cst_7 = arith.constant dense<0.000000e+00> : vector<256x128xf32>
    %9 = tpu.matmul %8, %6, %cst_7 {dimension_numbers = #tpu.dot_dimension_numbers<[1], [0], [0], [1], [0, 0, 1, 1], [], []>} : vector<256x256xbf16>, vector<256x128xbf16>, vector<256x128xf32> -> vector<256x128xf32>
    %10 = arith.subf %7, %9 : vector<256x128xf32>
    %11 = arith.extf %6 : vector<256x128xbf16> to vector<256x128xf32>
    %12 = arith.addf %11, %10 : vector<256x128xf32>
    %13 = arith.truncf %10 : vector<256x128xf32> to vector<256x128xbf16>
    %14 = arith.extf %13 : vector<256x128xbf16> to vector<256x128xf32>
    %c0_8 = arith.constant 0 : index
    %c0_9 = arith.constant 0 : index
    %15 = vector.load %arg3[%c0_8, %c0_9] : memref<256x256xbf16, #tpu.memory_space<vmem>>, vector<256x256xbf16>
    %cst_10 = arith.constant dense<0.000000e+00> : vector<256x128xf32>
    %16 = tpu.matmul %15, %13, %cst_10 {dimension_numbers = #tpu.dot_dimension_numbers<[1], [0], [0], [1], [0, 0, 1, 1], [], []>} : vector<256x256xbf16>, vector<256x128xbf16>, vector<256x128xf32> -> vector<256x128xf32>
    %17 = arith.subf %14, %16 : vector<256x128xf32>
    %cst_11 = arith.constant 2.000000e+00 : f32
    %18 = vector.broadcast %cst_11 : f32 to vector<256x128xf32>
    %19 = arith.mulf %18, %17 : vector<256x128xf32>
    %20 = arith.extf %6 : vector<256x128xbf16> to vector<256x128xf32>
    %21 = arith.subf %19, %20 : vector<256x128xf32>
    %22 = arith.addf %12, %21 : vector<256x128xf32>
    %23 = arith.truncf %21 : vector<256x128xf32> to vector<256x128xbf16>
    %24 = arith.extf %23 : vector<256x128xbf16> to vector<256x128xf32>
    %c0_12 = arith.constant 0 : index
    %c0_13 = arith.constant 0 : index
    %25 = vector.load %arg3[%c0_12, %c0_13] : memref<256x256xbf16, #tpu.memory_space<vmem>>, vector<256x256xbf16>
    %cst_14 = arith.constant dense<0.000000e+00> : vector<256x128xf32>
    %26 = tpu.matmul %25, %23, %cst_14 {dimension_numbers = #tpu.dot_dimension_numbers<[1], [0], [0], [1], [0, 0, 1, 1], [], []>} : vector<256x256xbf16>, vector<256x128xbf16>, vector<256x128xf32> -> vector<256x128xf32>
    %27 = arith.subf %24, %26 : vector<256x128xf32>
    %cst_15 = arith.constant 2.000000e+00 : f32
    %28 = vector.broadcast %cst_15 : f32 to vector<256x128xf32>
    %29 = arith.mulf %28, %27 : vector<256x128xf32>
    %30 = arith.extf %13 : vector<256x128xbf16> to vector<256x128xf32>
    %31 = arith.subf %29, %30 : vector<256x128xf32>
    %32 = arith.addf %22, %31 : vector<256x128xf32>
    %cst_16 = arith.constant 0.000000e+00 : f32
    %33 = vector.broadcast %cst_16 : f32 to vector<256x128xf32>
    %34 = arith.maximumf %32, %33 : vector<256x128xf32>
    %c0_17 = arith.constant 0 : index
    %c0_18 = arith.constant 0 : index
    %35 = vector.load %arg4[%c0_17, %c0_18] : memref<256x128xf32, #tpu.memory_space<vmem>>, vector<256x128xf32>
    tpu.vector_store %arg4[%c0_17, %c0_18], %34 {strides = array<i32>} : memref<256x128xf32, #tpu.memory_space<vmem>>, vector<256x128xf32>,
    return
  }
}

</mosaic_0001>

<llo_original>
// kernel: chebyshev_forward.1
$region0: #{chebyshev_forward.1}
  #allocation0 [shape = 'u32[]', space=smem, size = 0x4, offset = 0x4, fixed_abs, tag = 'smem constant byte address 0x4 - core index']
  #allocation1 [shape = 'u32[72,128]{1,0:T(1,128)}', space=vmem, size = 0x9000, scoped, tag = 'internal scratch']
  %s0 = inlined_call_operand.vmem [shape: f32[256,8], index: 0, kind: input, shape index: {}]
  %s1 = inlined_call_operand.vmem [shape: f32[8,128], index: 1, kind: input, shape index: {}]
  %s2 = inlined_call_operand.vmem [shape: f32[1,128], index: 2, kind: input, shape index: {}]
  %s3 = inlined_call_operand.vmem [shape: bf16[256,256], index: 3, kind: input, shape index: {}]
  %s4 = inlined_call_operand.vmem [shape: f32[256,128], index: 4, kind: output, shape index: {}]
  %s5 = sld [smem:[#allocation0]]
  $region26: #{chebyshev_forward.1} parent=0
    _
  %s7 = ssub.s32 1, %s5
  %s8 = scalar_select 0, %s7, %s5
  // Predicated region
  $region2: #{chebyshev_forward.1} parent=0 // pred_check
    _
  $region3: #{chebyshev_forward.1} parent=0 // pred_check_branch
    %10 = sbr.rel (0) target = $region5
  $region4: #{chebyshev_forward.1} parent=0 // pred_region
    _
  $region5: #{chebyshev_forward.1} parent=0 // pred_fallthru
    _
  // Predicated region
  $region6: #{chebyshev_forward.1} parent=0 // pred_check
    _
  $region7: #{chebyshev_forward.1} parent=0 // pred_check_branch
    %12 = sbr.rel (0) target = $region9
  $region8: #{chebyshev_forward.1} parent=0 // pred_region
    _
  $region9: #{chebyshev_forward.1} parent=0 // pred_fallthru
    _
  // Predicated region
  $region10: #{chebyshev_forward.1} parent=0 // pred_check
    _
  $region11: #{chebyshev_forward.1} parent=0 // pred_check_branch
    %14 = sbr.rel (0) target = $region13
  $region12: #{chebyshev_forward.1} parent=0 // pred_region
    _
  $region13: #{chebyshev_forward.1} parent=0 // pred_fallthru
    _
  // Predicated region
  $region14: #{chebyshev_forward.1} parent=0 // pred_check
    _
  $region15: #{chebyshev_forward.1} parent=0 // pred_check_branch
    %16 = sbr.rel (0) target = $region17
  $region16: #{chebyshev_forward.1} parent=0 // pred_region
    _
  $region17: #{chebyshev_forward.1} parent=0 // pred_fallthru
    _
  %v17 = vld [vmem:[%s0] sm:$0xff]
  %v18 = vld [vmem:[%s0 + $0x8] sm:$0xff]
  %v19 = vld [vmem:[%s0 + $0x10] sm:$0xff]
  %v20 = vld [vmem:[%s0 + $0x18] sm:$0xff]
  %v21 = vld [vmem:[%s0 + $0x20] sm:$0xff]
  %v22 = vld [vmem:[%s0 + $0x28] sm:$0xff]
  %v23 = vld [vmem:[%s0 + $0x30] sm:$0xff]
  %v24 = vld [vmem:[%s0 + $0x38] sm:$0xff]
  %v25 = vld [vmem:[%s0 + $0x40] sm:$0xff]
  %v26 = vld [vmem:[%s0 + $0x48] sm:$0xff]
  %v27 = vld [vmem:[%s0 + $0x50] sm:$0xff]
  %v28 = vld [vmem:[%s0 + $0x58] sm:$0xff]
  %v29 = vld [vmem:[%s0 + $0x60] sm:$0xff]
  %v30 = vld [vmem:[%s0 + $0x68] sm:$0xff]
  %v31 = vld [vmem:[%s0 + $0x70] sm:$0xff]
  %v32 = vld [vmem:[%s0 + $0x78] sm:$0xff]
  %v33 = vld [vmem:[%s0 + $0x80] sm:$0xff]
  %v34 = vld [vmem:[%s0 + $0x88] sm:$0xff]
  %v35 = vld [vmem:[%s0 + $0x90] sm:$0xff]
  %v36 = vld [vmem:[%s0 + $0x98] sm:$0xff]
  %v37 = vld [vmem:[%s0 + $0xa0] sm:$0xff]
  %v38 = vld [vmem:[%s0 + $0xa8] sm:$0xff]
  %v39 = vld [vmem:[%s0 + $0xb0] sm:$0xff]
  %v40 = vld [vmem:[%s0 + $0xb8] sm:$0xff]
  %v41 = vld [vmem:[%s0 + $0xc0] sm:$0xff]
  %v42 = vld [vmem:[%s0 + $0xc8] sm:$0xff]
  %v43 = vld [vmem:[%s0 + $0xd0] sm:$0xff]
  %v44 = vld [vmem:[%s0 + $0xd8] sm:$0xff]
  %v45 = vld [vmem:[%s0 + $0xe0] sm:$0xff]
  %v46 = vld [vmem:[%s0 + $0xe8] sm:$0xff]
  %v47 = vld [vmem:[%s0 + $0xf0] sm:$0xff]
  %v48 = vld [vmem:[%s0 + $0xf8] sm:$0xff]
  %v49 = vld [vmem:[%s1] sm:$0xff]
  %v50 = vld [vmem:[%s2] sm:$0x1]
  %v52 = vperm.slane %v50, 0
  %vm54 = vcmask 64512
  %v56 = vsel %vm54, %v17, 0
  %v59 = vsel %vm54, %v18, 0
  %v62 = vsel %vm54, %v19, 0
  %v65 = vsel %vm54, %v20, 0
  %v68 = vsel %vm54, %v21, 0
  %v71 = vsel %vm54, %v22, 0
  %v74 = vsel %vm54, %v23, 0
  %v77 = vsel %vm54, %v24, 0
  %v80 = vsel %vm54, %v25, 0
  %v83 = vsel %vm54, %v26, 0
  %v86 = vsel %vm54, %v27, 0
  %v89 = vsel %vm54, %v28, 0
  %v92 = vsel %vm54, %v29, 0
  %v95 = vsel %vm54, %v30, 0
  %v98 = vsel %vm54, %v31, 0
  %v101 = vsel %vm54, %v32, 0
  %v104 = vsel %vm54, %v33, 0
  %v107 = vsel %vm54, %v34, 0
  %v110 = vsel %vm54, %v35, 0
  %v113 = vsel %vm54, %v36, 0
  %v116 = vsel %vm54, %v37, 0
  %v119 = vsel %vm54, %v38, 0
  %v122 = vsel %vm54, %v39, 0
  %v125 = vsel %vm54, %v40, 0
  %v128 = vsel %vm54, %v41, 0
  %v131 = vsel %vm54, %v42, 0
  %v134 = vsel %vm54, %v43, 0
  %v137 = vsel %vm54, %v44, 0
  %v140 = vsel %vm54, %v45, 0
  %v143 = vsel %vm54, %v46, 0
  %v146 = vsel %vm54, %v47, 0
  %v149 = vsel %vm54, %v48, 0
  %151 = vmatpush.msra.mxu0 0.0
  %152 = vmatpush.msra.mxu0 0.0
  %153 = vmatpush.msra.mxu0 0.0
  %154 = vmatpush.msra.mxu0 0.0
  %155 = vmatpush.msra.mxu0 0.0
  %156 = vmatpush.msra.mxu0 0.0
  %157 = vmatpush.msra.mxu0 0.0
  %158 = vmatpush.msra.mxu0 0.0
  %159 = vmatpush.msra.mxu0 0.0
  %160 = vmatpush.msra.mxu0 0.0
  %161 = vmatpush.msra.mxu0 0.0
  %162 = vmatpush.msra.mxu0 0.0
  %163 = vmatpush.msra.mxu0 0.0
  %164 = vmatpush.msra.mxu0 0.0
  %165 = vmatpush.msra.mxu0 0.0
  %166 = vmatpush.msra.mxu0 %v49
  %167 = vmatmul.f32.gmra.mxu0 %v56
  %v168 = vpop.f32.mrf.mxu0
  %v169 = vadd.f32 %v52, %v168
  %170 = vmatmul.f32.gmra.mxu0 %v59
  %v171 = vpop.f32.mrf.mxu0
  %v172 = vadd.f32 %v52, %v171
  %173 = vmatmul.f32.gmra.mxu0 %v62
  %v174 = vpop.f32.mrf.mxu0
  %v175 = vadd.f32 %v52, %v174
  %176 = vmatmul.f32.gmra.mxu0 %v65
  %v177 = vpop.f32.mrf.mxu0
  %v178 = vadd.f32 %v52, %v177
  %179 = vmatmul.f32.gmra.mxu0 %v68
  %v180 = vpop.f32.mrf.mxu0
  %v181 = vadd.f32 %v52, %v180
  %182 = vmatmul.f32.gmra.mxu0 %v71
  %v183 = vpop.f32.mrf.mxu0
  %v184 = vadd.f32 %v52, %v183
  %185 = vmatmul.f32.gmra.mxu0 %v74
  %v186 = vpop.f32.mrf.mxu0
  %v187 = vadd.f32 %v52, %v186
  %188 = vmatmul.f32.gmra.mxu0 %v77
  %v189 = vpop.f32.mrf.mxu0
  %v190 = vadd.f32 %v52, %v189
  %191 = vmatmul.f32.gmra.mxu0 %v80
  %v192 = vpop.f32.mrf.mxu0
  %v193 = vadd.f32 %v52, %v192
  %194 = vmatmul.f32.gmra.mxu0 %v83
  %v195 = vpop.f32.mrf.mxu0
  %v196 = vadd.f32 %v52, %v195
  %197 = vmatmul.f32.gmra.mxu0 %v86
  %v198 = vpop.f32.mrf.mxu0
  %v199 = vadd.f32 %v52, %v198
  %200 = vmatmul.f32.gmra.mxu0 %v89
  %v201 = vpop.f32.mrf.mxu0
  %v202 = vadd.f32 %v52, %v201
  %203 = vmatmul.f32.gmra.mxu0 %v92
  %v204 = vpop.f32.mrf.mxu0
  %v205 = vadd.f32 %v52, %v204
  %206 = vmatmul.f32.gmra.mxu0 %v95
  %v207 = vpop.f32.mrf.mxu0
  %v208 = vadd.f32 %v52, %v207
  %209 = vmatmul.f32.gmra.mxu0 %v98
  %v210 = vpop.f32.mrf.mxu0
  %v211 = vadd.f32 %v52, %v210
  %212 = vmatmul.f32.gmra.mxu0 %v101
  %v213 = vpop.f32.mrf.mxu0
  %v214 = vadd.f32 %v52, %v213
  %215 = vmatmul.f32.gmra.mxu0 %v104
  %v216 = vpop.f32.mrf.mxu0
  %v217 = vadd.f32 %v52, %v216
  %218 = vmatmul.f32.gmra.mxu0 %v107
  %v219 = vpop.f32.mrf.mxu0
  %v220 = vadd.f32 %v52, %v219
  %221 = vmatmul.f32.gmra.mxu0 %v110
  %v222 = vpop.f32.mrf.mxu0
  %v223 = vadd.f32 %v52, %v222
  %224 = vmatmul.f32.gmra.mxu0 %v113
  %v225 = vpop.f32.mrf.mxu0
  %v226 = vadd.f32 %v52, %v225
  %227 = vmatmul.f32.gmra.mxu0 %v116
  %v228 = vpop.f32.mrf.mxu0
  %v229 = vadd.f32 %v52, %v228
  %230 = vmatmul.f32.gmra.mxu0 %v119
  %v231 = vpop.f32.mrf.mxu0
  %v232 = vadd.f32 %v52, %v231
  %233 = vmatmul.f32.gmra.mxu0 %v122
  %v234 = vpop.f32.mrf.mxu0
  %v235 = vadd.f32 %v52, %v234
  %236 = vmatmul.f32.gmra.mxu0 %v125
  %v237 = vpop.f32.mrf.mxu0
  %v238 = vadd.f32 %v52, %v237
  %239 = vmatmul.f32.gmra.mxu0 %v128
  %v240 = vpop.f32.mrf.mxu0
  %v241 = vadd.f32 %v52, %v240
  %242 = vmatmul.f32.gmra.mxu0 %v131
  %v243 = vpop.f32.mrf.mxu0
  %v244 = vadd.f32 %v52, %v243
  %245 = vmatmul.f32.gmra.mxu0 %v134
  %v246 = vpop.f32.mrf.mxu0
  %v247 = vadd.f32 %v52, %v246
  %248 = vmatmul.f32.gmra.mxu0 %v137
  %v249 = vpop.f32.mrf.mxu0
  %v250 = vadd.f32 %v52, %v249
  %251 = vmatmul.f32.gmra.mxu0 %v140
  %v252 = vpop.f32.mrf.mxu0
  %v253 = vadd.f32 %v52, %v252
  %254 = vmatmul.f32.gmra.mxu0 %v143
  %v255 = vpop.f32.mrf.mxu0
  %v256 = vadd.f32 %v52, %v255
  %257 = vmatmul.f32.gmra.mxu0 %v146
  %v258 = vpop.f32.mrf.mxu0
  %v259 = vadd.f32 %v52, %v258
  %260 = vmatmul.f32.gmra.mxu0 %v149
  %v261 = vpop.f32.mrf.mxu0
  %v262 = vadd.f32 %v52, %v261
  %263 = vdwg.mxu0
  %v264 = vpack.c.bf16 %v169, %v169
  %v265 = vpack.c.bf16 %v172, %v172
  %v266 = vpack.c.bf16 %v175, %v175
  %v267 = vpack.c.bf16 %v178, %v178
  %v268 = vpack.c.bf16 %v181, %v181
  %v269 = vpack.c.bf16 %v184, %v184
  %v270 = vpack.c.bf16 %v187, %v187
  %v271 = vpack.c.bf16 %v190, %v190
  %v272 = vpack.c.bf16 %v193, %v193
  %v273 = vpack.c.bf16 %v196, %v196
  %v274 = vpack.c.bf16 %v199, %v199
  %v275 = vpack.c.bf16 %v202, %v202
  %v276 = vpack.c.bf16 %v205, %v205
  %v277 = vpack.c.bf16 %v208, %v208
  %v278 = vpack.c.bf16 %v211, %v211
  %v279 = vpack.c.bf16 %v214, %v214
  %v280 = vpack.c.bf16 %v217, %v217
  %v281 = vpack.c.bf16 %v220, %v220
  %v282 = vpack.c.bf16 %v223, %v223
  %v283 = vpack.c.bf16 %v226, %v226
  %v284 = vpack.c.bf16 %v229, %v229
  %v285 = vpack.c.bf16 %v232, %v232
  %v286 = vpack.c.bf16 %v235, %v235
  %v287 = vpack.c.bf16 %v238, %v238
  %v288 = vpack.c.bf16 %v241, %v241
  %v289 = vpack.c.bf16 %v244, %v244
  %v290 = vpack.c.bf16 %v247, %v247
  %v291 = vpack.c.bf16 %v250, %v250
  %v292 = vpack.c.bf16 %v253, %v253
  %v293 = vpack.c.bf16 %v256, %v256
  %v294 = vpack.c.bf16 %v259, %v259
  %v295 = vpack.c.bf16 %v262, %v262
  %v296 = vunpack.c.l.bf16 %v264
  %v297 = vunpack.c.l.bf16 %v265
  %v298 = vunpack.c.l.bf16 %v266
  %v299 = vunpack.c.l.bf16 %v267
  %v300 = vunpack.c.l.bf16 %v268
  %v301 = vunpack.c.l.bf16 %v269
  %v302 = vunpack.c.l.bf16 %v270
  %v303 = vunpack.c.l.bf16 %v271
  %v304 = vunpack.c.l.bf16 %v272
  %v305 = vunpack.c.l.bf16 %v273
  %v306 = vunpack.c.l.bf16 %v274
  %v307 = vunpack.c.l.bf16 %v275
  %v308 = vunpack.c.l.bf16 %v276
  %v309 = vunpack.c.l.bf16 %v277
  %v310 = vunpack.c.l.bf16 %v278
  %v311 = vunpack.c.l.bf16 %v279
  %v312 = vunpack.c.l.bf16 %v280
  %v313 = vunpack.c.l.bf16 %v281
  %v314 = vunpack.c.l.bf16 %v282
  %v315 = vunpack.c.l.bf16 %v283
  %v316 = vunpack.c.l.bf16 %v284
  %v317 = vunpack.c.l.bf16 %v285
  %v318 = vunpack.c.l.bf16 %v286
  %v319 = vunpack.c.l.bf16 %v287
  %v320 = vunpack.c.l.bf16 %v288
  %v321 = vunpack.c.l.bf16 %v289
  %v322 = vunpack.c.l.bf16 %v290
  %v323 = vunpack.c.l.bf16 %v291
  %v324 = vunpack.c.l.bf16 %v292
  %v325 = vunpack.c.l.bf16 %v293
  %v326 = vunpack.c.l.bf16 %v294
  %v327 = vunpack.c.l.bf16 %v295
  %v328 = vld [vmem:[%s3] sm:$0xff]
  %v329 = vld [vmem:[%s3 + $0x8] sm:$0xff]
  %v330 = vld [vmem:[%s3 + $0x10] sm:$0xff]
  %v331 = vld [vmem:[%s3 + $0x18] sm:$0xff]
  %v332 = vld [vmem:[%s3 + $0x20] sm:$0xff]
  %v333 = vld [vmem:[%s3 + $0x28] sm:$0xff]
  %v334 = vld [vmem:[%s3 + $0x30] sm:$0xff]
  %v335 = vld [vmem:[%s3 + $0x38] sm:$0xff]
  %v336 = vld [vmem:[%s3 + $0x40] sm:$0xff]
  %v337 = vld [vmem:[%s3 + $0x48] sm:$0xff]
  %v338 = vld [vmem:[%s3 + $0x50] sm:$0xff]
  %v339 = vld [vmem:[%s3 + $0x58] sm:$0xff]
  %v340 = vld [vmem:[%s3 + $0x60] sm:$0xff]
  %v341 = vld [vmem:[%s3 + $0x68] sm:$0xff]
  %v342 = vld [vmem:[%s3 + $0x70] sm:$0xff]
  %v343 = vld [vmem:[%s3 + $0x78] sm:$0xff]
  %v344 = vld [vmem:[%s3 + $0x80] sm:$0xff]
  %v345 = vld [vmem:[%s3 + $0x88] sm:$0xff]
  %v346 = vld [vmem:[%s3 + $0x90] sm:$0xff]
  %v347 = vld [vmem:[%s3 + $0x98] sm:$0xff]
  %v348 = vld [vmem:[%s3 + $0xa0] sm:$0xff]
  %v349 = vld [vmem:[%s3 + $0xa8] sm:$0xff]
  %v350 = vld [vmem:[%s3 + $0xb0] sm:$0xff]
  %v351 = vld [vmem:[%s3 + $0xb8] sm:$0xff]
  %v352 = vld [vmem:[%s3 + $0xc0] sm:$0xff]
  %v353 = vld [vmem:[%s3 + $0xc8] sm:$0xff]
  %v354 = vld [vmem:[%s3 + $0xd0] sm:$0xff]
  %v355 = vld [vmem:[%s3 + $0xd8] sm:$0xff]
  %v356 = vld [vmem:[%s3 + $0xe0] sm:$0xff]
  %v357 = vld [vmem:[%s3 + $0xe8] sm:$0xff]
  %v358 = vld [vmem:[%s3 + $0xf0] sm:$0xff]
  %v359 = vld [vmem:[%s3 + $0xf8] sm:$0xff]
  %v392 = vunpack.c.l.b16 %v328
  %v393 = vunpack.c.h.b16 %v328
  %v394 = vunpack.c.l.b16 %v329
  %v395 = vunpack.c.h.b16 %v329
  %v396 = vunpack.c.l.b16 %v330
  %v397 = vunpack.c.h.b16 %v330
  %v398 = vunpack.c.l.b16 %v331
  %v399 = vunpack.c.h.b16 %v331
  %v400 = vunpack.c.l.b16 %v332
  %v401 = vunpack.c.h.b16 %v332
  %v402 = vunpack.c.l.b16 %v333
  %v403 = vunpack.c.h.b16 %v333
  %v404 = vunpack.c.l.b16 %v334
  %v405 = vunpack.c.h.b16 %v334
  %v406 = vunpack.c.l.b16 %v335
  %v407 = vunpack.c.h.b16 %v335
  %v408 = vunpack.c.l.b16 %v336
  %v409 = vunpack.c.h.b16 %v336
  %v410 = vunpack.c.l.b16 %v337
  %v411 = vunpack.c.h.b16 %v337
  %v412 = vunpack.c.l.b16 %v338
  %v413 = vunpack.c.h.b16 %v338
  %v414 = vunpack.c.l.b16 %v339
  %v415 = vunpack.c.h.b16 %v339
  %v416 = vunpack.c.l.b16 %v340
  %v417 = vunpack.c.h.b16 %v340
  %v418 = vunpack.c.l.b16 %v341
  %v419 = vunpack.c.h.b16 %v341
  %v420 = vunpack.c.l.b16 %v342
  %v421 = vunpack.c.h.b16 %v342
  %v422 = vunpack.c.l.b16 %v343
  %v423 = vunpack.c.h.b16 %v343
  %v424 = vunpack.c.l.b16 %v344
  %v425 = vunpack.c.h.b16 %v344
  %v426 = vunpack.c.l.b16 %v345
  %v427 = vunpack.c.h.b16 %v345
  %v428 = vunpack.c.l.b16 %v346
  %v429 = vunpack.c.h.b16 %v346
  %v430 = vunpack.c.l.b16 %v347
  %v431 = vunpack.c.h.b16 %v347
  %v432 = vunpack.c.l.b16 %v348
  %v433 = vunpack.c.h.b16 %v348
  %v434 = vunpack.c.l.b16 %v349
  %v435 = vunpack.c.h.b16 %v349
  %v436 = vunpack.c.l.b16 %v350
  %v437 = vunpack.c.h.b16 %v350
  %v438 = vunpack.c.l.b16 %v351
  %v439 = vunpack.c.h.b16 %v351
  %v440 = vunpack.c.l.b16 %v352
  %v441 = vunpack.c.h.b16 %v352
  %v442 = vunpack.c.l.b16 %v353
  %v443 = vunpack.c.h.b16 %v353
  %v444 = vunpack.c.l.b16 %v354
  %v445 = vunpack.c.h.b16 %v354
  %v446 = vunpack.c.l.b16 %v355
  %v447 = vunpack.c.h.b16 %v355
  %v448 = vunpack.c.l.b16 %v356
  %v449 = vunpack.c.h.b16 %v356
  %v450 = vunpack.c.l.b16 %v357
  %v451 = vunpack.c.h.b16 %v357
  %v452 = vunpack.c.l.b16 %v358
  %v453 = vunpack.c.h.b16 %v358
  %v454 = vunpack.c.l.b16 %v359
  %v455 = vunpack.c.h.b16 %v359
  %v456 = vpack.c.b16 %v394, %v392
  %v457 = vpack.c.b16 %v395, %v393
  %v458 = vpack.c.b16 %v398, %v396
  %v459 = vpack.c.b16 %v399, %v397
  %v460 = vpack.c.b16 %v402, %v400
  %v461 = vpack.c.b16 %v403, %v401
  %v462 = vpack.c.b16 %v406, %v404
  %v463 = vpack.c.b16 %v407, %v405
  %v464 = vpack.c.b16 %v410, %v408
  %v465 = vpack.c.b16 %v411, %v409
  %v466 = vpack.c.b16 %v414, %v412
  %v467 = vpack.c.b16 %v415, %v413
  %v468 = vpack.c.b16 %v418, %v416
  %v469 = vpack.c.b16 %v419, %v417
  %v470 = vpack.c.b16 %v422, %v420
  %v471 = vpack.c.b16 %v423, %v421
  %v472 = vpack.c.b16 %v426, %v424
  %v473 = vpack.c.b16 %v427, %v425
  %v474 = vpack.c.b16 %v430, %v428
  %v475 = vpack.c.b16 %v431, %v429
  %v476 = vpack.c.b16 %v434, %v432
  %v477 = vpack.c.b16 %v435, %v433
  %v478 = vpack.c.b16 %v438, %v436
  %v479 = vpack.c.b16 %v439, %v437
  %v480 = vpack.c.b16 %v442, %v440
  %v481 = vpack.c.b16 %v443, %v441
  %v482 = vpack.c.b16 %v446, %v444
  %v483 = vpack.c.b16 %v447, %v445
  %v484 = vpack.c.b16 %v450, %v448
  %v485 = vpack.c.b16 %v451, %v449
  %v486 = vpack.c.b16 %v454, %v452
  %v487 = vpack.c.b16 %v455, %v453
  %v552 = vunpack.c.l.b16 %v264
  %v553 = vunpack.c.l.b16 %v265
  %v554 = vunpack.c.l.b16 %v266
  %v555 = vunpack.c.l.b16 %v267
  %v556 = vunpack.c.l.b16 %v268
  %v557 = vunpack.c.l.b16 %v269
  %v558 = vunpack.c.l.b16 %v270
  %v559 = vunpack.c.l.b16 %v271
  %v560 = vunpack.c.l.b16 %v272
  %v561 = vunpack.c.l.b16 %v273
  %v562 = vunpack.c.l.b16 %v274
  %v563 = vunpack.c.l.b16 %v275
  %v564 = vunpack.c.l.b16 %v276
  %v565 = vunpack.c.l.b16 %v277
  %v566 = vunpack.c.l.b16 %v278
  %v567 = vunpack.c.l.b16 %v279
  %v568 = vunpack.c.l.b16 %v280
  %v569 = vunpack.c.l.b16 %v281
  %v570 = vunpack.c.l.b16 %v282
  %v571 = vunpack.c.l.b16 %v283
  %v572 = vunpack.c.l.b16 %v284
  %v573 = vunpack.c.l.b16 %v285
  %v574 = vunpack.c.l.b16 %v286
  %v575 = vunpack.c.l.b16 %v287
  %v576 = vunpack.c.l.b16 %v288
  %v577 = vunpack.c.l.b16 %v289
  %v578 = vunpack.c.l.b16 %v290
  %v579 = vunpack.c.l.b16 %v291
  %v580 = vunpack.c.l.b16 %v292
  %v581 = vunpack.c.l.b16 %v293
  %v582 = vunpack.c.l.b16 %v294
  %v583 = vunpack.c.l.b16 %v295
  %v584 = vpack.c.b16 %v553, %v552
  %v585 = vpack.c.b16 %v555, %v554
  %v586 = vpack.c.b16 %v557, %v556
  %v587 = vpack.c.b16 %v559, %v558
  %v588 = vpack.c.b16 %v561, %v560
  %v589 = vpack.c.b16 %v563, %v562
  %v590 = vpack.c.b16 %v565, %v564
  %v591 = vpack.c.b16 %v567, %v566
  %v592 = vpack.c.b16 %v569, %v568
  %v593 = vpack.c.b16 %v571, %v570
  %v594 = vpack.c.b16 %v573, %v572
  %v595 = vpack.c.b16 %v575, %v574
  %v596 = vpack.c.b16 %v577, %v576
  %v597 = vpack.c.b16 %v579, %v578
  %v598 = vpack.c.b16 %v581, %v580
  %v599 = vpack.c.b16 %v583, %v582
  %616 = vmatpush.bf16.msra.mxu0 %v591
  %617 = vmatpush.bf16.msra.mxu0 %v590
  %618 = vmatpush.bf16.msra.mxu0 %v589
  %619 = vmatpush.bf16.msra.mxu0 %v588
  %620 = vmatpush.bf16.msra.mxu0 %v587
  %621 = vmatpush.bf16.msra.mxu0 %v586
  %622 = vmatpush.bf16.msra.mxu0 %v585
  %623 = vmatpush.bf16.msra.mxu0 %v584
  %624 = vmatmul.bf16.gmra.mxu0 %v456
  %v625 = vpop.f32.mrf.mxu0
  %v626 = vadd.f32 0.0, %v625
  %v627 = vpop.f32.mrf.mxu0
  %v628 = vadd.f32 0.0, %v627
  %629 = vmatmul.bf16.gmra.mxu0 %v458
  %v630 = vpop.f32.mrf.mxu0
  %v631 = vadd.f32 0.0, %v630
  %v632 = vpop.f32.mrf.mxu0
  %v633 = vadd.f32 0.0, %v632
  %634 = vmatmul.bf16.gmra.mxu0 %v460
  %v635 = vpop.f32.mrf.mxu0
  %v636 = vadd.f32 0.0, %v635
  %v637 = vpop.f32.mrf.mxu0
  %v638 = vadd.f32 0.0, %v637
  %639 = vmatmul.bf16.gmra.mxu0 %v462
  %v640 = vpop.f32.mrf.mxu0
  %v641 = vadd.f32 0.0, %v640
  %v642 = vpop.f32.mrf.mxu0
  %v643 = vadd.f32 0.0, %v642
  %644 = vmatmul.bf16.gmra.mxu0 %v464
  %v645 = vpop.f32.mrf.mxu0
  %v646 = vadd.f32 0.0, %v645
  %v647 = vpop.f32.mrf.mxu0
  %v648 = vadd.f32 0.0, %v647
  %649 = vmatmul.bf16.gmra.mxu0 %v466
  %v650 = vpop.f32.mrf.mxu0
  %v651 = vadd.f32 0.0, %v650
  %v652 = vpop.f32.mrf.mxu0
  %v653 = vadd.f32 0.0, %v652
  %654 = vmatmul.bf16.gmra.mxu0 %v468
  %v655 = vpop.f32.mrf.mxu0
  %v656 = vadd.f32 0.0, %v655
  %v657 = vpop.f32.mrf.mxu0
  %v658 = vadd.f32 0.0, %v657
  %659 = vmatmul.bf16.gmra.mxu0 %v470
  %v660 = vpop.f32.mrf.mxu0
  %v661 = vadd.f32 0.0, %v660
  %v662 = vpop.f32.mrf.mxu0
  %v663 = vadd.f32 0.0, %v662
  %664 = vmatmul.bf16.gmra.mxu0 %v472
  %v665 = vpop.f32.mrf.mxu0
  %v666 = vadd.f32 0.0, %v665
  %v667 = vpop.f32.mrf.mxu0
  %v668 = vadd.f32 0.0, %v667
  %669 = vmatmul.bf16.gmra.mxu0 %v474
  %v670 = vpop.f32.mrf.mxu0
  %v671 = vadd.f32 0.0, %v670
  %v672 = vpop.f32.mrf.mxu0
  %v673 = vadd.f32 0.0, %v672
  %674 = vmatmul.bf16.gmra.mxu0 %v476
  %v675 = vpop.f32.mrf.mxu0
  %v676 = vadd.f32 0.0, %v675
  %v677 = vpop.f32.mrf.mxu0
  %v678 = vadd.f32 0.0, %v677
  %679 = vmatmul.bf16.gmra.mxu0 %v478
  %v680 = vpop.f32.mrf.mxu0
  %v681 = vadd.f32 0.0, %v680
  %v682 = vpop.f32.mrf.mxu0
  %v683 = vadd.f32 0.0, %v682
  %684 = vmatmul.bf16.gmra.mxu0 %v480
  %v685 = vpop.f32.mrf.mxu0
  %v686 = vadd.f32 0.0, %v685
  %v687 = vpop.f32.mrf.mxu0
  %v688 = vadd.f32 0.0, %v687
  %689 = vmatmul.bf16.gmra.mxu0 %v482
  %v690 = vpop.f32.mrf.mxu0
  %v691 = vadd.f32 0.0, %v690
  %v692 = vpop.f32.mrf.mxu0
  %v693 = vadd.f32 0.0, %v692
  %694 = vmatmul.bf16.gmra.mxu0 %v484
  %v695 = vpop.f32.mrf.mxu0
  %v696 = vadd.f32 0.0, %v695
  %v697 = vpop.f32.mrf.mxu0
  %v698 = vadd.f32 0.0, %v697
  %699 = vmatmul.bf16.gmra.mxu0 %v486
  %v700 = vpop.f32.mrf.mxu0
  %v701 = vadd.f32 0.0, %v700
  %v702 = vpop.f32.mrf.mxu0
  %v703 = vadd.f32 0.0, %v702
  %704 = vdwg.mxu0
  %705 = vmatpush.bf16.msra.mxu0 %v599
  %706 = vmatpush.bf16.msra.mxu0 %v598
  %707 = vmatpush.bf16.msra.mxu0 %v597
  %708 = vmatpush.bf16.msra.mxu0 %v596
  %709 = vmatpush.bf16.msra.mxu0 %v595
  %710 = vmatpush.bf16.msra.mxu0 %v594
  %711 = vmatpush.bf16.msra.mxu0 %v593
  %712 = vmatpush.bf16.msra.mxu0 %v592
  %713 = vmatmul.bf16.gmra.mxu0 %v457
  %v714 = vpop.f32.mrf.mxu0
  %v715 = vadd.f32 %v626, %v714
  %v716 = vpop.f32.mrf.mxu0
  %v717 = vadd.f32 %v628, %v716
  %718 = vmatmul.bf16.gmra.mxu0 %v459
  %v719 = vpop.f32.mrf.mxu0
  %v720 = vadd.f32 %v631, %v719
  %v721 = vpop.f32.mrf.mxu0
  %v722 = vadd.f32 %v633, %v721
  %723 = vmatmul.bf16.gmra.mxu0 %v461
  %v724 = vpop.f32.mrf.mxu0
  %v725 = vadd.f32 %v636, %v724
  %v726 = vpop.f32.mrf.mxu0
  %v727 = vadd.f32 %v638, %v726
  %728 = vmatmul.bf16.gmra.mxu0 %v463
  %v729 = vpop.f32.mrf.mxu0
  %v730 = vadd.f32 %v641, %v729
  %v731 = vpop.f32.mrf.mxu0
  %v732 = vadd.f32 %v643, %v731
  %733 = vmatmul.bf16.gmra.mxu0 %v465
  %v734 = vpop.f32.mrf.mxu0
  %v735 = vadd.f32 %v646, %v734
  %v736 = vpop.f32.mrf.mxu0
  %v737 = vadd.f32 %v648, %v736
  %738 = vmatmul.bf16.gmra.mxu0 %v467
  %v739 = vpop.f32.mrf.mxu0
  %v740 = vadd.f32 %v651, %v739
  %v741 = vpop.f32.mrf.mxu0
  %v742 = vadd.f32 %v653, %v741
  %743 = vmatmul.bf16.gmra.mxu0 %v469
  %v744 = vpop.f32.mrf.mxu0
  %v745 = vadd.f32 %v656, %v744
  %v746 = vpop.f32.mrf.mxu0
  %v747 = vadd.f32 %v658, %v746
  %748 = vmatmul.bf16.gmra.mxu0 %v471
  %v749 = vpop.f32.mrf.mxu0
  %v750 = vadd.f32 %v661, %v749
  %v751 = vpop.f32.mrf.mxu0
  %v752 = vadd.f32 %v663, %v751
  %753 = vmatmul.bf16.gmra.mxu0 %v473
  %v754 = vpop.f32.mrf.mxu0
  %v755 = vadd.f32 %v666, %v754
  %v756 = vpop.f32.mrf.mxu0
  %v757 = vadd.f32 %v668, %v756
  %758 = vmatmul.bf16.gmra.mxu0 %v475
  %v759 = vpop.f32.mrf.mxu0
  %v760 = vadd.f32 %v671, %v759
  %v761 = vpop.f32.mrf.mxu0
  %v762 = vadd.f32 %v673, %v761
  %763 = vmatmul.bf16.gmra.mxu0 %v477
  %v764 = vpop.f32.mrf.mxu0
  %v765 = vadd.f32 %v676, %v764
  %v766 = vpop.f32.mrf.mxu0
  %v767 = vadd.f32 %v678, %v766
  %768 = vmatmul.bf16.gmra.mxu0 %v479
  %v769 = vpop.f32.mrf.mxu0
  %v770 = vadd.f32 %v681, %v769
  %v771 = vpop.f32.mrf.mxu0
  %v772 = vadd.f32 %v683, %v771
  %773 = vmatmul.bf16.gmra.mxu0 %v481
  %v774 = vpop.f32.mrf.mxu0
  %v775 = vadd.f32 %v686, %v774
  %v776 = vpop.f32.mrf.mxu0
  %v777 = vadd.f32 %v688, %v776
  %778 = vmatmul.bf16.gmra.mxu0 %v483
  %v779 = vpop.f32.mrf.mxu0
  %v780 = vadd.f32 %v691, %v779
  %v781 = vpop.f32.mrf.mxu0
  %v782 = vadd.f32 %v693, %v781
  %783 = vmatmul.bf16.gmra.mxu0 %v485
  %v784 = vpop.f32.mrf.mxu0
  %v785 = vadd.f32 %v696, %v784
  %v786 = vpop.f32.mrf.mxu0
  %v787 = vadd.f32 %v698, %v786
  %788 = vmatmul.bf16.gmra.mxu0 %v487
  %v789 = vpop.f32.mrf.mxu0
  %v790 = vadd.f32 %v701, %v789
  %v791 = vpop.f32.mrf.mxu0
  %v792 = vadd.f32 %v703, %v791
  %793 = vdwg.mxu0
  %v794 = vsub.f32 %v296, %v715
  %v795 = vsub.f32 %v297, %v717
  %v796 = vsub.f32 %v298, %v720
  %v797 = vsub.f32 %v299, %v722
  %v798 = vsub.f32 %v300, %v725
  %v799 = vsub.f32 %v301, %v727
  %v800 = vsub.f32 %v302, %v730
  %v801 = vsub.f32 %v303, %v732
  %v802 = vsub.f32 %v304, %v735
  %v803 = vsub.f32 %v305, %v737
  %v804 = vsub.f32 %v306, %v740
  %v805 = vsub.f32 %v307, %v742
  %v806 = vsub.f32 %v308, %v745
  %v807 = vsub.f32 %v309, %v747
  %v808 = vsub.f32 %v310, %v750
  %v809 = vsub.f32 %v311, %v752
  %v810 = vsub.f32 %v312, %v755
  %v811 = vsub.f32 %v313, %v757
  %v812 = vsub.f32 %v314, %v760
  %v813 = vsub.f32 %v315, %v762
  %v814 = vsub.f32 %v316, %v765
  %v815 = vsub.f32 %v317, %v767
  %v816 = vsub.f32 %v318, %v770
  %v817 = vsub.f32 %v319, %v772
  %v818 = vsub.f32 %v320, %v775
  %v819 = vsub.f32 %v321, %v777
  %v820 = vsub.f32 %v322, %v780
  %v821 = vsub.f32 %v323, %v782
  %v822 = vsub.f32 %v324, %v785
  %v823 = vsub.f32 %v325, %v787
  %v824 = vsub.f32 %v326, %v790
  %v825 = vsub.f32 %v327, %v792
  %v826 = vadd.f32 %v296, %v794
  %v827 = vadd.f32 %v297, %v795
  %v828 = vadd.f32 %v298, %v796
  %v829 = vadd.f32 %v299, %v797
  %v830 = vadd.f32 %v300, %v798
  %v831 = vadd.f32 %v301, %v799
  %v832 = vadd.f32 %v302, %v800
  %v833 = vadd.f32 %v303, %v801
  %v834 = vadd.f32 %v304, %v802
  %v835 = vadd.f32 %v305, %v803
  %v836 = vadd.f32 %v306, %v804
  %v837 = vadd.f32 %v307, %v805
  %v838 = vadd.f32 %v308, %v806
  %v839 = vadd.f32 %v309, %v807
  %v840 = vadd.f32 %v310, %v808
  %v841 = vadd.f32 %v311, %v809
  %v842 = vadd.f32 %v312, %v810
  %v843 = vadd.f32 %v313, %v811
  %v844 = vadd.f32 %v314, %v812
  %v845 = vadd.f32 %v315, %v813
  %v846 = vadd.f32 %v316, %v814
  %v847 = vadd.f32 %v317, %v815
  %v848 = vadd.f32 %v318, %v816
  %v849 = vadd.f32 %v319, %v817
  %v850 = vadd.f32 %v320, %v818
  %v851 = vadd.f32 %v321, %v819
  %v852 = vadd.f32 %v322, %v820
  %v853 = vadd.f32 %v323, %v821
  %v854 = vadd.f32 %v324, %v822
  %v855 = vadd.f32 %v325, %v823
  %v856 = vadd.f32 %v326, %v824
  %v857 = vadd.f32 %v327, %v825
  %v858 = vpack.c.bf16 %v794, %v794
  %v859 = vpack.c.bf16 %v795, %v795
  %v860 = vpack.c.bf16 %v796, %v796
  %v861 = vpack.c.bf16 %v797, %v797
  %v862 = vpack.c.bf16 %v798, %v798
  %v863 = vpack.c.bf16 %v799, %v799
  %v864 = vpack.c.bf16 %v800, %v800
  %v865 = vpack.c.bf16 %v801, %v801
  %v866 = vpack.c.bf16 %v802, %v802
  %v867 = vpack.c.bf16 %v803, %v803
  %v868 = vpack.c.bf16 %v804, %v804
  %v869 = vpack.c.bf16 %v805, %v805
  %v870 = vpack.c.bf16 %v806, %v806
  %v871 = vpack.c.bf16 %v807, %v807
  %v872 = vpack.c.bf16 %v808, %v808
  %v873 = vpack.c.bf16 %v809, %v809
  %v874 = vpack.c.bf16 %v810, %v810
  %v875 = vpack.c.bf16 %v811, %v811
  %v876 = vpack.c.bf16 %v812, %v812
  %v877 = vpack.c.bf16 %v813, %v813
  %v878 = vpack.c.bf16 %v814, %v814
  %v879 = vpack.c.bf16 %v815, %v815
  %v880 = vpack.c.bf16 %v816, %v816
  %v881 = vpack.c.bf16 %v817, %v817
  %v882 = vpack.c.bf16 %v818, %v818
  %v883 = vpack.c.bf16 %v819, %v819
  %v884 = vpack.c.bf16 %v820, %v820
  %v885 = vpack.c.bf16 %v821, %v821
  %v886 = vpack.c.bf16 %v822, %v822
  %v887 = vpack.c.bf16 %v823, %v823
  %v888 = vpack.c.bf16 %v824, %v824
  %v889 = vpack.c.bf16 %v825, %v825
  %v890 = vunpack.c.l.bf16 %v858
  %v891 = vunpack.c.l.bf16 %v859
  %v892 = vunpack.c.l.bf16 %v860
  %v893 = vunpack.c.l.bf16 %v861
  %v894 = vunpack.c.l.bf16 %v862
  %v895 = vunpack.c.l.bf16 %v863
  %v896 = vunpack.c.l.bf16 %v864
  %v897 = vunpack.c.l.bf16 %v865
  %v898 = vunpack.c.l.bf16 %v866
  %v899 = vunpack.c.l.bf16 %v867
  %v900 = vunpack.c.l.bf16 %v868
  %v901 = vunpack.c.l.bf16 %v869
  %v902 = vunpack.c.l.bf16 %v870
  %v903 = vunpack.c.l.bf16 %v871
  %v904 = vunpack.c.l.bf16 %v872
  %v905 = vunpack.c.l.bf16 %v873
  %v906 = vunpack.c.l.bf16 %v874
  %v907 = vunpack.c.l.bf16 %v875
  %v908 = vunpack.c.l.bf16 %v876
  %v909 = vunpack.c.l.bf16 %v877
  %v910 = vunpack.c.l.bf16 %v878
  %v911 = vunpack.c.l.bf16 %v879
  %v912 = vunpack.c.l.bf16 %v880
  %v913 = vunpack.c.l.bf16 %v881
  %v914 = vunpack.c.l.bf16 %v882
  %v915 = vunpack.c.l.bf16 %v883
  %v916 = vunpack.c.l.bf16 %v884
  %v917 = vunpack.c.l.bf16 %v885
  %v918 = vunpack.c.l.bf16 %v886
  %v919 = vunpack.c.l.bf16 %v887
  %v920 = vunpack.c.l.bf16 %v888
  %v921 = vunpack.c.l.bf16 %v889
  %v954 = vunpack.c.l.b16 %v858
  %v955 = vunpack.c.l.b16 %v859
  %v956 = vunpack.c.l.b16 %v860
  %v957 = vunpack.c.l.b16 %v861
  %v958 = vunpack.c.l.b16 %v862
  %v959 = vunpack.c.l.b16 %v863
  %v960 = vunpack.c.l.b16 %v864
  %v961 = vunpack.c.l.b16 %v865
  %v962 = vunpack.c.l.b16 %v866
  %v963 = vunpack.c.l.b16 %v867
  %v964 = vunpack.c.l.b16 %v868
  %v965 = vunpack.c.l.b16 %v869
  %v966 = vunpack.c.l.b16 %v870
  %v967 = vunpack.c.l.b16 %v871
  %v968 = vunpack.c.l.b16 %v872
  %v969 = vunpack.c.l.b16 %v873
  %v970 = vunpack.c.l.b16 %v874
  %v971 = vunpack.c.l.b16 %v875
  %v972 = vunpack.c.l.b16 %v876
  %v973 = vunpack.c.l.b16 %v877
  %v974 = vunpack.c.l.b16 %v878
  %v975 = vunpack.c.l.b16 %v879
  %v976 = vunpack.c.l.b16 %v880
  %v977 = vunpack.c.l.b16 %v881
  %v978 = vunpack.c.l.b16 %v882
  %v979 = vunpack.c.l.b16 %v883
  %v980 = vunpack.c.l.b16 %v884
  %v981 = vunpack.c.l.b16 %v885
  %v982 = vunpack.c.l.b16 %v886
  %v983 = vunpack.c.l.b16 %v887
  %v984 = vunpack.c.l.b16 %v888
  %v985 = vunpack.c.l.b16 %v889
  %v986 = vpack.c.b16 %v955, %v954
  %v987 = vpack.c.b16 %v957, %v956
  %v988 = vpack.c.b16 %v959, %v958
  %v989 = vpack.c.b16 %v961, %v960
  %v990 = vpack.c.b16 %v963, %v962
  %v991 = vpack.c.b16 %v965, %v964
  %v992 = vpack.c.b16 %v967, %v966
  %v993 = vpack.c.b16 %v969, %v968
  %v994 = vpack.c.b16 %v971, %v970
  %v995 = vpack.c.b16 %v973, %v972
  %v996 = vpack.c.b16 %v975, %v974
  %v997 = vpack.c.b16 %v977, %v976
  %v998 = vpack.c.b16 %v979, %v978
  %v999 = vpack.c.b16 %v981, %v980
  %v1000 = vpack.c.b16 %v983, %v982
  %v1001 = vpack.c.b16 %v985, %v984
  %1018 = vmatpush.bf16.msra.mxu0 %v993
  %1019 = vmatpush.bf16.msra.mxu0 %v992
  %1020 = vmatpush.bf16.msra.mxu0 %v991
  %1021 = vmatpush.bf16.msra.mxu0 %v990
  %1022 = vmatpush.bf16.msra.mxu0 %v989
  %1023 = vmatpush.bf16.msra.mxu0 %v988
  %1024 = vmatpush.bf16.msra.mxu0 %v987
  %1025 = vmatpush.bf16.msra.mxu0 %v986
  %1026 = vmatmul.bf16.gmra.mxu0 %v456
  %v1027 = vpop.f32.mrf.mxu0
  %v1028 = vadd.f32 0.0, %v1027
  %v1029 = vpop.f32.mrf.mxu0
  %v1030 = vadd.f32 0.0, %v1029
  %1031 = vmatmul.bf16.gmra.mxu0 %v458
  %v1032 = vpop.f32.mrf.mxu0
  %v1033 = vadd.f32 0.0, %v1032
  %v1034 = vpop.f32.mrf.mxu0
  %v1035 = vadd.f32 0.0, %v1034
  %1036 = vmatmul.bf16.gmra.mxu0 %v460
  %v1037 = vpop.f32.mrf.mxu0
  %v1038 = vadd.f32 0.0, %v1037
  %v1039 = vpop.f32.mrf.mxu0
  %v1040 = vadd.f32 0.0, %v1039
  %1041 = vmatmul.bf16.gmra.mxu0 %v462
  %v1042 = vpop.f32.mrf.mxu0
  %v1043 = vadd.f32 0.0, %v1042
  %v1044 = vpop.f32.mrf.mxu0
  %v1045 = vadd.f32 0.0, %v1044
  %1046 = vmatmul.bf16.gmra.mxu0 %v464
  %v1047 = vpop.f32.mrf.mxu0
  %v1048 = vadd.f32 0.0, %v1047
  %v1049 = vpop.f32.mrf.mxu0
  %v1050 = vadd.f32 0.0, %v1049
  %1051 = vmatmul.bf16.gmra.mxu0 %v466
  %v1052 = vpop.f32.mrf.mxu0
  %v1053 = vadd.f32 0.0, %v1052
  %v1054 = vpop.f32.mrf.mxu0
  %v1055 = vadd.f32 0.0, %v1054
  %1056 = vmatmul.bf16.gmra.mxu0 %v468
  %v1057 = vpop.f32.mrf.mxu0
  %v1058 = vadd.f32 0.0, %v1057
  %v1059 = vpop.f32.mrf.mxu0
  %v1060 = vadd.f32 0.0, %v1059
  %1061 = vmatmul.bf16.gmra.mxu0 %v470
  %v1062 = vpop.f32.mrf.mxu0
  %v1063 = vadd.f32 0.0, %v1062
  %v1064 = vpop.f32.mrf.mxu0
  %v1065 = vadd.f32 0.0, %v1064
  %1066 = vmatmul.bf16.gmra.mxu0 %v472
  %v1067 = vpop.f32.mrf.mxu0
  %v1068 = vadd.f32 0.0, %v1067
  %v1069 = vpop.f32.mrf.mxu0
  %v1070 = vadd.f32 0.0, %v1069
  %1071 = vmatmul.bf16.gmra.mxu0 %v474
  %v1072 = vpop.f32.mrf.mxu0
  %v1073 = vadd.f32 0.0, %v1072
  %v1074 = vpop.f32.mrf.mxu0
  %v1075 = vadd.f32 0.0, %v1074
  %1076 = vmatmul.bf16.gmra.mxu0 %v476
  %v1077 = vpop.f32.mrf.mxu0
  %v1078 = vadd.f32 0.0, %v1077
  %v1079 = vpop.f32.mrf.mxu0
  %v1080 = vadd.f32 0.0, %v1079
  %1081 = vmatmul.bf16.gmra.mxu0 %v478
  %v1082 = vpop.f32.mrf.mxu0
  %v1083 = vadd.f32 0.0, %v1082
  %v1084 = vpop.f32.mrf.mxu0
  %v1085 = vadd.f32 0.0, %v1084
  %1086 = vmatmul.bf16.gmra.mxu0 %v480
  %v1087 = vpop.f32.mrf.mxu0
  %v1088 = vadd.f32 0.0, %v1087
  %v1089 = vpop.f32.mrf.mxu0
  %v1090 = vadd.f32 0.0, %v1089
  %1091 = vmatmul.bf16.gmra.mxu0 %v482
  %v1092 = vpop.f32.mrf.mxu0
  %v1093 = vadd.f32 0.0, %v1092
  %v1094 = vpop.f32.mrf.mxu0
  %v1095 = vadd.f32 0.0, %v1094
  %1096 = vmatmul.bf16.gmra.mxu0 %v484
  %v1097 = vpop.f32.mrf.mxu0
  %v1098 = vadd.f32 0.0, %v1097
  %v1099 = vpop.f32.mrf.mxu0
  %v1100 = vadd.f32 0.0, %v1099
  %1101 = vmatmul.bf16.gmra.mxu0 %v486
  %v1102 = vpop.f32.mrf.mxu0
  %v1103 = vadd.f32 0.0, %v1102
  %v1104 = vpop.f32.mrf.mxu0
  %v1105 = vadd.f32 0.0, %v1104
  %1106 = vdwg.mxu0
  %1107 = vmatpush.bf16.msra.mxu0 %v1001
  %1108 = vmatpush.bf16.msra.mxu0 %v1000
  %1109 = vmatpush.bf16.msra.mxu0 %v999
  %1110 = vmatpush.bf16.msra.mxu0 %v998
  %1111 = vmatpush.bf16.msra.mxu0 %v997
  %1112 = vmatpush.bf16.msra.mxu0 %v996
  %1113 = vmatpush.bf16.msra.mxu0 %v995
  %1114 = vmatpush.bf16.msra.mxu0 %v994
  %1115 = vmatmul.bf16.gmra.mxu0 %v457
  %v1116 = vpop.f32.mrf.mxu0
  %v1117 = vadd.f32 %v1028, %v1116
  %v1118 = vpop.f32.mrf.mxu0
  %v1119 = vadd.f32 %v1030, %v1118
  %1120 = vmatmul.bf16.gmra.mxu0 %v459
  %v1121 = vpop.f32.mrf.mxu0
  %v1122 = vadd.f32 %v1033, %v1121
  %v1123 = vpop.f32.mrf.mxu0
  %v1124 = vadd.f32 %v1035, %v1123
  %1125 = vmatmul.bf16.gmra.mxu0 %v461
  %v1126 = vpop.f32.mrf.mxu0
  %v1127 = vadd.f32 %v1038, %v1126
  %v1128 = vpop.f32.mrf.mxu0
  %v1129 = vadd.f32 %v1040, %v1128
  %1130 = vmatmul.bf16.gmra.mxu0 %v463
  %v1131 = vpop.f32.mrf.mxu0
  %v1132 = vadd.f32 %v1043, %v1131
  %v1133 = vpop.f32.mrf.mxu0
  %v1134 = vadd.f32 %v1045, %v1133
  %1135 = vmatmul.bf16.gmra.mxu0 %v465
  %v1136 = vpop.f32.mrf.mxu0
  %v1137 = vadd.f32 %v1048, %v1136
  %v1138 = vpop.f32.mrf.mxu0
  %v1139 = vadd.f32 %v1050, %v1138
  %1140 = vmatmul.bf16.gmra.mxu0 %v467
  %v1141 = vpop.f32.mrf.mxu0
  %v1142 = vadd.f32 %v1053, %v1141
  %v1143 = vpop.f32.mrf.mxu0
  %v1144 = vadd.f32 %v1055, %v1143
  %1145 = vmatmul.bf16.gmra.mxu0 %v469
  %v1146 = vpop.f32.mrf.mxu0
  %v1147 = vadd.f32 %v1058, %v1146
  %v1148 = vpop.f32.mrf.mxu0
  %v1149 = vadd.f32 %v1060, %v1148
  %1150 = vmatmul.bf16.gmra.mxu0 %v471
  %v1151 = vpop.f32.mrf.mxu0
  %v1152 = vadd.f32 %v1063, %v1151
  %v1153 = vpop.f32.mrf.mxu0
  %v1154 = vadd.f32 %v1065, %v1153
  %1155 = vmatmul.bf16.gmra.mxu0 %v473
  %v1156 = vpop.f32.mrf.mxu0
  %v1157 = vadd.f32 %v1068, %v1156
  %v1158 = vpop.f32.mrf.mxu0
  %v1159 = vadd.f32 %v1070, %v1158
  %1160 = vmatmul.bf16.gmra.mxu0 %v475
  %v1161 = vpop.f32.mrf.mxu0
  %v1162 = vadd.f32 %v1073, %v1161
  %v1163 = vpop.f32.mrf.mxu0
  %v1164 = vadd.f32 %v1075, %v1163
  %1165 = vmatmul.bf16.gmra.mxu0 %v477
  %v1166 = vpop.f32.mrf.mxu0
  %v1167 = vadd.f32 %v1078, %v1166
  %v1168 = vpop.f32.mrf.mxu0
  %v1169 = vadd.f32 %v1080, %v1168
  %1170 = vmatmul.bf16.gmra.mxu0 %v479
  %v1171 = vpop.f32.mrf.mxu0
  %v1172 = vadd.f32 %v1083, %v1171
  %v1173 = vpop.f32.mrf.mxu0
  %v1174 = vadd.f32 %v1085, %v1173
  %1175 = vmatmul.bf16.gmra.mxu0 %v481
  %v1176 = vpop.f32.mrf.mxu0
  %v1177 = vadd.f32 %v1088, %v1176
  %v1178 = vpop.f32.mrf.mxu0
  %v1179 = vadd.f32 %v1090, %v1178
  %1180 = vmatmul.bf16.gmra.mxu0 %v483
  %v1181 = vpop.f32.mrf.mxu0
  %v1182 = vadd.f32 %v1093, %v1181
  %v1183 = vpop.f32.mrf.mxu0
  %v1184 = vadd.f32 %v1095, %v1183
  %1185 = vmatmul.bf16.gmra.mxu0 %v485
  %v1186 = vpop.f32.mrf.mxu0
  %v1187 = vadd.f32 %v1098, %v1186
  %v1188 = vpop.f32.mrf.mxu0
  %v1189 = vadd.f32 %v1100, %v1188
  %1190 = vmatmul.bf16.gmra.mxu0 %v487
  %v1191 = vpop.f32.mrf.mxu0
  %v1192 = vadd.f32 %v1103, %v1191
  %v1193 = vpop.f32.mrf.mxu0
  %v1194 = vadd.f32 %v1105, %v1193
  %1195 = vdwg.mxu0
  %v1196 = vsub.f32 %v890, %v1117
  %v1197 = vsub.f32 %v891, %v1119
  %v1198 = vsub.f32 %v892, %v1122
  %v1199 = vsub.f32 %v893, %v1124
  %v1200 = vsub.f32 %v894, %v1127
  %v1201 = vsub.f32 %v895, %v1129
  %v1202 = vsub.f32 %v896, %v1132
  %v1203 = vsub.f32 %v897, %v1134
  %v1204 = vsub.f32 %v898, %v1137
  %v1205 = vsub.f32 %v899, %v1139
  %v1206 = vsub.f32 %v900, %v1142
  %v1207 = vsub.f32 %v901, %v1144
  %v1208 = vsub.f32 %v902, %v1147
  %v1209 = vsub.f32 %v903, %v1149
  %v1210 = vsub.f32 %v904, %v1152
  %v1211 = vsub.f32 %v905, %v1154
  %v1212 = vsub.f32 %v906, %v1157
  %v1213 = vsub.f32 %v907, %v1159
  %v1214 = vsub.f32 %v908, %v1162
  %v1215 = vsub.f32 %v909, %v1164
  %v1216 = vsub.f32 %v910, %v1167
  %v1217 = vsub.f32 %v911, %v1169
  %v1218 = vsub.f32 %v912, %v1172
  %v1219 = vsub.f32 %v913, %v1174
  %v1220 = vsub.f32 %v914, %v1177
  %v1221 = vsub.f32 %v915, %v1179
  %v1222 = vsub.f32 %v916, %v1182
  %v1223 = vsub.f32 %v917, %v1184
  %v1224 = vsub.f32 %v918, %v1187
  %v1225 = vsub.f32 %v919, %v1189
  %v1226 = vsub.f32 %v920, %v1192
  %v1227 = vsub.f32 %v921, %v1194
  %v1228 = vmul.f32 %v1196, 2.0
  %v1229 = vmul.f32 %v1197, 2.0
  %v1230 = vmul.f32 %v1198, 2.0
  %v1231 = vmul.f32 %v1199, 2.0
  %v1232 = vmul.f32 %v1200, 2.0
  %v1233 = vmul.f32 %v1201, 2.0
  %v1234 = vmul.f32 %v1202, 2.0
  %v1235 = vmul.f32 %v1203, 2.0
  %v1236 = vmul.f32 %v1204, 2.0
  %v1237 = vmul.f32 %v1205, 2.0
  %v1238 = vmul.f32 %v1206, 2.0
  %v1239 = vmul.f32 %v1207, 2.0
  %v1240 = vmul.f32 %v1208, 2.0
  %v1241 = vmul.f32 %v1209, 2.0
  %v1242 = vmul.f32 %v1210, 2.0
  %v1243 = vmul.f32 %v1211, 2.0
  %v1244 = vmul.f32 %v1212, 2.0
  %v1245 = vmul.f32 %v1213, 2.0
  %v1246 = vmul.f32 %v1214, 2.0
  %v1247 = vmul.f32 %v1215, 2.0
  %v1248 = vmul.f32 %v1216, 2.0
  %v1249 = vmul.f32 %v1217, 2.0
  %v1250 = vmul.f32 %v1218, 2.0
  %v1251 = vmul.f32 %v1219, 2.0
  %v1252 = vmul.f32 %v1220, 2.0
  %v1253 = vmul.f32 %v1221, 2.0
  %v1254 = vmul.f32 %v1222, 2.0
  %v1255 = vmul.f32 %v1223, 2.0
  %v1256 = vmul.f32 %v1224, 2.0
  %v1257 = vmul.f32 %v1225, 2.0
  %v1258 = vmul.f32 %v1226, 2.0
  %v1259 = vmul.f32 %v1227, 2.0
  %v1260 = vsub.f32 %v1228, %v296
  %v1261 = vsub.f32 %v1229, %v297
  %v1262 = vsub.f32 %v1230, %v298
  %v1263 = vsub.f32 %v1231, %v299
  %v1264 = vsub.f32 %v1232, %v300
  %v1265 = vsub.f32 %v1233, %v301
  %v1266 = vsub.f32 %v1234, %v302
  %v1267 = vsub.f32 %v1235, %v303
  %v1268 = vsub.f32 %v1236, %v304
  %v1269 = vsub.f32 %v1237, %v305
  %v1270 = vsub.f32 %v1238, %v306
  %v1271 = vsub.f32 %v1239, %v307
  %v1272 = vsub.f32 %v1240, %v308
  %v1273 = vsub.f32 %v1241, %v309
  %v1274 = vsub.f32 %v1242, %v310
  %v1275 = vsub.f32 %v1243, %v311
  %v1276 = vsub.f32 %v1244, %v312
  %v1277 = vsub.f32 %v1245, %v313
  %v1278 = vsub.f32 %v1246, %v314
  %v1279 = vsub.f32 %v1247, %v315
  %v1280 = vsub.f32 %v1248, %v316
  %v1281 = vsub.f32 %v1249, %v317
  %v1282 = vsub.f32 %v1250, %v318
  %v1283 = vsub.f32 %v1251, %v319
  %v1284 = vsub.f32 %v1252, %v320
  %v1285 = vsub.f32 %v1253, %v321
  %v1286 = vsub.f32 %v1254, %v322
  %v1287 = vsub.f32 %v1255, %v323
  %v1288 = vsub.f32 %v1256, %v324
  %v1289 = vsub.f32 %v1257, %v325
  %v1290 = vsub.f32 %v1258, %v326
  %v1291 = vsub.f32 %v1259, %v327
  %v1292 = vadd.f32 %v826, %v1260
  %v1293 = vadd.f32 %v827, %v1261
  %v1294 = vadd.f32 %v828, %v1262
  %v1295 = vadd.f32 %v829, %v1263
  %v1296 = vadd.f32 %v830, %v1264
  %v1297 = vadd.f32 %v831, %v1265
  %v1298 = vadd.f32 %v832, %v1266
  %v1299 = vadd.f32 %v833, %v1267
  %v1300 = vadd.f32 %v834, %v1268
  %v1301 = vadd.f32 %v835, %v1269
  %v1302 = vadd.f32 %v836, %v1270
  %v1303 = vadd.f32 %v837, %v1271
  %v1304 = vadd.f32 %v838, %v1272
  %v1305 = vadd.f32 %v839, %v1273
  %v1306 = vadd.f32 %v840, %v1274
  %v1307 = vadd.f32 %v841, %v1275
  %v1308 = vadd.f32 %v842, %v1276
  %v1309 = vadd.f32 %v843, %v1277
  %v1310 = vadd.f32 %v844, %v1278
  %v1311 = vadd.f32 %v845, %v1279
  %v1312 = vadd.f32 %v846, %v1280
  %v1313 = vadd.f32 %v847, %v1281
  %v1314 = vadd.f32 %v848, %v1282
  %v1315 = vadd.f32 %v849, %v1283
  %v1316 = vadd.f32 %v850, %v1284
  %v1317 = vadd.f32 %v851, %v1285
  %v1318 = vadd.f32 %v852, %v1286
  %v1319 = vadd.f32 %v853, %v1287
  %v1320 = vadd.f32 %v854, %v1288
  %v1321 = vadd.f32 %v855, %v1289
  %v1322 = vadd.f32 %v856, %v1290
  %v1323 = vadd.f32 %v857, %v1291
  %v1324 = vpack.c.bf16 %v1260, %v1260
  %v1325 = vpack.c.bf16 %v1261, %v1261
  %v1326 = vpack.c.bf16 %v1262, %v1262
  %v1327 = vpack.c.bf16 %v1263, %v1263
  %v1328 = vpack.c.bf16 %v1264, %v1264
  %v1329 = vpack.c.bf16 %v1265, %v1265
  %v1330 = vpack.c.bf16 %v1266, %v1266
  %v1331 = vpack.c.bf16 %v1267, %v1267
  %v1332 = vpack.c.bf16 %v1268, %v1268
  %v1333 = vpack.c.bf16 %v1269, %v1269
  %v1334 = vpack.c.bf16 %v1270, %v1270
  %v1335 = vpack.c.bf16 %v1271, %v1271
  %v1336 = vpack.c.bf16 %v1272, %v1272
  %v1337 = vpack.c.bf16 %v1273, %v1273
  %v1338 = vpack.c.bf16 %v1274, %v1274
  %v1339 = vpack.c.bf16 %v1275, %v1275
  %v1340 = vpack.c.bf16 %v1276, %v1276
  %v1341 = vpack.c.bf16 %v1277, %v1277
  %v1342 = vpack.c.bf16 %v1278, %v1278
  %v1343 = vpack.c.bf16 %v1279, %v1279
  %v1344 = vpack.c.bf16 %v1280, %v1280
  %v1345 = vpack.c.bf16 %v1281, %v1281
  %v1346 = vpack.c.bf16 %v1282, %v1282
  %v1347 = vpack.c.bf16 %v1283, %v1283
  %v1348 = vpack.c.bf16 %v1284, %v1284
  %v1349 = vpack.c.bf16 %v1285, %v1285
  %v1350 = vpack.c.bf16 %v1286, %v1286
  %v1351 = vpack.c.bf16 %v1287, %v1287
  %v1352 = vpack.c.bf16 %v1288, %v1288
  %v1353 = vpack.c.bf16 %v1289, %v1289
  %v1354 = vpack.c.bf16 %v1290, %v1290
  %v1355 = vpack.c.bf16 %v1291, %v1291
  %v1356 = vunpack.c.l.bf16 %v1324
  %v1357 = vunpack.c.l.bf16 %v1325
  %v1358 = vunpack.c.l.bf16 %v1326
  %v1359 = vunpack.c.l.bf16 %v1327
  %v1360 = vunpack.c.l.bf16 %v1328
  %v1361 = vunpack.c.l.bf16 %v1329
  %v1362 = vunpack.c.l.bf16 %v1330
  %v1363 = vunpack.c.l.bf16 %v1331
  %v1364 = vunpack.c.l.bf16 %v1332
  %v1365 = vunpack.c.l.bf16 %v1333
  %v1366 = vunpack.c.l.bf16 %v1334
  %v1367 = vunpack.c.l.bf16 %v1335
  %v1368 = vunpack.c.l.bf16 %v1336
  %v1369 = vunpack.c.l.bf16 %v1337
  %v1370 = vunpack.c.l.bf16 %v1338
  %v1371 = vunpack.c.l.bf16 %v1339
  %v1372 = vunpack.c.l.bf16 %v1340
  %v1373 = vunpack.c.l.bf16 %v1341
  %v1374 = vunpack.c.l.bf16 %v1342
  %v1375 = vunpack.c.l.bf16 %v1343
  %v1376 = vunpack.c.l.bf16 %v1344
  %v1377 = vunpack.c.l.bf16 %v1345
  %v1378 = vunpack.c.l.bf16 %v1346
  %v1379 = vunpack.c.l.bf16 %v1347
  %v1380 = vunpack.c.l.bf16 %v1348
  %v1381 = vunpack.c.l.bf16 %v1349
  %v1382 = vunpack.c.l.bf16 %v1350
  %v1383 = vunpack.c.l.bf16 %v1351
  %v1384 = vunpack.c.l.bf16 %v1352
  %v1385 = vunpack.c.l.bf16 %v1353
  %v1386 = vunpack.c.l.bf16 %v1354
  %v1387 = vunpack.c.l.bf16 %v1355
  %v1420 = vunpack.c.l.b16 %v1324
  %v1421 = vunpack.c.l.b16 %v1325
  %v1422 = vunpack.c.l.b16 %v1326
  %v1423 = vunpack.c.l.b16 %v1327
  %v1424 = vunpack.c.l.b16 %v1328
  %v1425 = vunpack.c.l.b16 %v1329
  %v1426 = vunpack.c.l.b16 %v1330
  %v1427 = vunpack.c.l.b16 %v1331
  %v1428 = vunpack.c.l.b16 %v1332
  %v1429 = vunpack.c.l.b16 %v1333
  %v1430 = vunpack.c.l.b16 %v1334
  %v1431 = vunpack.c.l.b16 %v1335
  %v1432 = vunpack.c.l.b16 %v1336
  %v1433 = vunpack.c.l.b16 %v1337
  %v1434 = vunpack.c.l.b16 %v1338
  %v1435 = vunpack.c.l.b16 %v1339
  %v1436 = vunpack.c.l.b16 %v1340
  %v1437 = vunpack.c.l.b16 %v1341
  %v1438 = vunpack.c.l.b16 %v1342
  %v1439 = vunpack.c.l.b16 %v1343
  %v1440 = vunpack.c.l.b16 %v1344
  %v1441 = vunpack.c.l.b16 %v1345
  %v1442 = vunpack.c.l.b16 %v1346
  %v1443 = vunpack.c.l.b16 %v1347
  %v1444 = vunpack.c.l.b16 %v1348
  %v1445 = vunpack.c.l.b16 %v1349
  %v1446 = vunpack.c.l.b16 %v1350
  %v1447 = vunpack.c.l.b16 %v1351
  %v1448 = vunpack.c.l.b16 %v1352
  %v1449 = vunpack.c.l.b16 %v1353
  %v1450 = vunpack.c.l.b16 %v1354
  %v1451 = vunpack.c.l.b16 %v1355
  %v1452 = vpack.c.b16 %v1421, %v1420
  %v1453 = vpack.c.b16 %v1423, %v1422
  %v1454 = vpack.c.b16 %v1425, %v1424
  %v1455 = vpack.c.b16 %v1427, %v1426
  %v1456 = vpack.c.b16 %v1429, %v1428
  %v1457 = vpack.c.b16 %v1431, %v1430
  %v1458 = vpack.c.b16 %v1433, %v1432
  %v1459 = vpack.c.b16 %v1435, %v1434
  %v1460 = vpack.c.b16 %v1437, %v1436
  %v1461 = vpack.c.b16 %v1439, %v1438
  %v1462 = vpack.c.b16 %v1441, %v1440
  %v1463 = vpack.c.b16 %v1443, %v1442
  %v1464 = vpack.c.b16 %v1445, %v1444
  %v1465 = vpack.c.b16 %v1447, %v1446
  %v1466 = vpack.c.b16 %v1449, %v1448
  %v1467 = vpack.c.b16 %v1451, %v1450
  %1484 = vmatpush.bf16.msra.mxu0 %v1459
  %1485 = vmatpush.bf16.msra.mxu0 %v1458
  %1486 = vmatpush.bf16.msra.mxu0 %v1457
  %1487 = vmatpush.bf16.msra.mxu0 %v1456
  %1488 = vmatpush.bf16.msra.mxu0 %v1455
  %1489 = vmatpush.bf16.msra.mxu0 %v1454
  %1490 = vmatpush.bf16.msra.mxu0 %v1453
  %1491 = vmatpush.bf16.msra.mxu0 %v1452
  %1492 = vmatmul.bf16.gmra.mxu0 %v456
  %v1493 = vpop.f32.mrf.mxu0
  %v1494 = vadd.f32 0.0, %v1493
  %v1495 = vpop.f32.mrf.mxu0
  %v1496 = vadd.f32 0.0, %v1495
  %1497 = vmatmul.bf16.gmra.mxu0 %v458
  %v1498 = vpop.f32.mrf.mxu0
  %v1499 = vadd.f32 0.0, %v1498
  %v1500 = vpop.f32.mrf.mxu0
  %v1501 = vadd.f32 0.0, %v1500
  %1502 = vmatmul.bf16.gmra.mxu0 %v460
  %v1503 = vpop.f32.mrf.mxu0
  %v1504 = vadd.f32 0.0, %v1503
  %v1505 = vpop.f32.mrf.mxu0
  %v1506 = vadd.f32 0.0, %v1505
  %1507 = vmatmul.bf16.gmra.mxu0 %v462
  %v1508 = vpop.f32.mrf.mxu0
  %v1509 = vadd.f32 0.0, %v1508
  %v1510 = vpop.f32.mrf.mxu0
  %v1511 = vadd.f32 0.0, %v1510
  %1512 = vmatmul.bf16.gmra.mxu0 %v464
  %v1513 = vpop.f32.mrf.mxu0
  %v1514 = vadd.f32 0.0, %v1513
  %v1515 = vpop.f32.mrf.mxu0
  %v1516 = vadd.f32 0.0, %v1515
  %1517 = vmatmul.bf16.gmra.mxu0 %v466
  %v1518 = vpop.f32.mrf.mxu0
  %v1519 = vadd.f32 0.0, %v1518
  %v1520 = vpop.f32.mrf.mxu0
  %v1521 = vadd.f32 0.0, %v1520
  %1522 = vmatmul.bf16.gmra.mxu0 %v468
  %v1523 = vpop.f32.mrf.mxu0
  %v1524 = vadd.f32 0.0, %v1523
  %v1525 = vpop.f32.mrf.mxu0
  %v1526 = vadd.f32 0.0, %v1525
  %1527 = vmatmul.bf16.gmra.mxu0 %v470
  %v1528 = vpop.f32.mrf.mxu0
  %v1529 = vadd.f32 0.0, %v1528
  %v1530 = vpop.f32.mrf.mxu0
  %v1531 = vadd.f32 0.0, %v1530
  %1532 = vmatmul.bf16.gmra.mxu0 %v472
  %v1533 = vpop.f32.mrf.mxu0
  %v1534 = vadd.f32 0.0, %v1533
  %v1535 = vpop.f32.mrf.mxu0
  %v1536 = vadd.f32 0.0, %v1535
  %1537 = vmatmul.bf16.gmra.mxu0 %v474
  %v1538 = vpop.f32.mrf.mxu0
  %v1539 = vadd.f32 0.0, %v1538
  %v1540 = vpop.f32.mrf.mxu0
  %v1541 = vadd.f32 0.0, %v1540
  %1542 = vmatmul.bf16.gmra.mxu0 %v476
  %v1543 = vpop.f32.mrf.mxu0
  %v1544 = vadd.f32 0.0, %v1543
  %v1545 = vpop.f32.mrf.mxu0
  %v1546 = vadd.f32 0.0, %v1545
  %1547 = vmatmul.bf16.gmra.mxu0 %v478
  %v1548 = vpop.f32.mrf.mxu0
  %v1549 = vadd.f32 0.0, %v1548
  %v1550 = vpop.f32.mrf.mxu0
  %v1551 = vadd.f32 0.0, %v1550
  %1552 = vmatmul.bf16.gmra.mxu0 %v480
  %v1553 = vpop.f32.mrf.mxu0
  %v1554 = vadd.f32 0.0, %v1553
  %v1555 = vpop.f32.mrf.mxu0
  %v1556 = vadd.f32 0.0, %v1555
  %1557 = vmatmul.bf16.gmra.mxu0 %v482
  %v1558 = vpop.f32.mrf.mxu0
  %v1559 = vadd.f32 0.0, %v1558
  %v1560 = vpop.f32.mrf.mxu0
  %v1561 = vadd.f32 0.0, %v1560
  %1562 = vmatmul.bf16.gmra.mxu0 %v484
  %v1563 = vpop.f32.mrf.mxu0
  %v1564 = vadd.f32 0.0, %v1563
  %v1565 = vpop.f32.mrf.mxu0
  %v1566 = vadd.f32 0.0, %v1565
  %1567 = vmatmul.bf16.gmra.mxu0 %v486
  %v1568 = vpop.f32.mrf.mxu0
  %v1569 = vadd.f32 0.0, %v1568
  %v1570 = vpop.f32.mrf.mxu0
  %v1571 = vadd.f32 0.0, %v1570
  %1572 = vdwg.mxu0
  %1573 = vmatpush.bf16.msra.mxu0 %v1467
  %1574 = vmatpush.bf16.msra.mxu0 %v1466
  %1575 = vmatpush.bf16.msra.mxu0 %v1465
  %1576 = vmatpush.bf16.msra.mxu0 %v1464
  %1577 = vmatpush.bf16.msra.mxu0 %v1463
  %1578 = vmatpush.bf16.msra.mxu0 %v1462
  %1579 = vmatpush.bf16.msra.mxu0 %v1461
  %1580 = vmatpush.bf16.msra.mxu0 %v1460
  %1581 = vmatmul.bf16.gmra.mxu0 %v457
  %v1582 = vpop.f32.mrf.mxu0
  %v1583 = vadd.f32 %v1494, %v1582
  %v1584 = vpop.f32.mrf.mxu0
  %v1585 = vadd.f32 %v1496, %v1584
  %1586 = vmatmul.bf16.gmra.mxu0 %v459
  %v1587 = vpop.f32.mrf.mxu0
  %v1588 = vadd.f32 %v1499, %v1587
  %v1589 = vpop.f32.mrf.mxu0
  %v1590 = vadd.f32 %v1501, %v1589
  %1591 = vmatmul.bf16.gmra.mxu0 %v461
  %v1592 = vpop.f32.mrf.mxu0
  %v1593 = vadd.f32 %v1504, %v1592
  %v1594 = vpop.f32.mrf.mxu0
  %v1595 = vadd.f32 %v1506, %v1594
  %1596 = vmatmul.bf16.gmra.mxu0 %v463
  %v1597 = vpop.f32.mrf.mxu0
  %v1598 = vadd.f32 %v1509, %v1597
  %v1599 = vpop.f32.mrf.mxu0
  %v1600 = vadd.f32 %v1511, %v1599
  %1601 = vmatmul.bf16.gmra.mxu0 %v465
  %v1602 = vpop.f32.mrf.mxu0
  %v1603 = vadd.f32 %v1514, %v1602
  %v1604 = vpop.f32.mrf.mxu0
  %v1605 = vadd.f32 %v1516, %v1604
  %1606 = vmatmul.bf16.gmra.mxu0 %v467
  %v1607 = vpop.f32.mrf.mxu0
  %v1608 = vadd.f32 %v1519, %v1607
  %v1609 = vpop.f32.mrf.mxu0
  %v1610 = vadd.f32 %v1521, %v1609
  %1611 = vmatmul.bf16.gmra.mxu0 %v469
  %v1612 = vpop.f32.mrf.mxu0
  %v1613 = vadd.f32 %v1524, %v1612
  %v1614 = vpop.f32.mrf.mxu0
  %v1615 = vadd.f32 %v1526, %v1614
  %1616 = vmatmul.bf16.gmra.mxu0 %v471
  %v1617 = vpop.f32.mrf.mxu0
  %v1618 = vadd.f32 %v1529, %v1617
  %v1619 = vpop.f32.mrf.mxu0
  %v1620 = vadd.f32 %v1531, %v1619
  %1621 = vmatmul.bf16.gmra.mxu0 %v473
  %v1622 = vpop.f32.mrf.mxu0
  %v1623 = vadd.f32 %v1534, %v1622
  %v1624 = vpop.f32.mrf.mxu0
  %v1625 = vadd.f32 %v1536, %v1624
  %1626 = vmatmul.bf16.gmra.mxu0 %v475
  %v1627 = vpop.f32.mrf.mxu0
  %v1628 = vadd.f32 %v1539, %v1627
  %v1629 = vpop.f32.mrf.mxu0
  %v1630 = vadd.f32 %v1541, %v1629
  %1631 = vmatmul.bf16.gmra.mxu0 %v477
  %v1632 = vpop.f32.mrf.mxu0
  %v1633 = vadd.f32 %v1544, %v1632
  %v1634 = vpop.f32.mrf.mxu0
  %v1635 = vadd.f32 %v1546, %v1634
  %1636 = vmatmul.bf16.gmra.mxu0 %v479
  %v1637 = vpop.f32.mrf.mxu0
  %v1638 = vadd.f32 %v1549, %v1637
  %v1639 = vpop.f32.mrf.mxu0
  %v1640 = vadd.f32 %v1551, %v1639
  %1641 = vmatmul.bf16.gmra.mxu0 %v481
  %v1642 = vpop.f32.mrf.mxu0
  %v1643 = vadd.f32 %v1554, %v1642
  %v1644 = vpop.f32.mrf.mxu0
  %v1645 = vadd.f32 %v1556, %v1644
  %1646 = vmatmul.bf16.gmra.mxu0 %v483
  %v1647 = vpop.f32.mrf.mxu0
  %v1648 = vadd.f32 %v1559, %v1647
  %v1649 = vpop.f32.mrf.mxu0
  %v1650 = vadd.f32 %v1561, %v1649
  %1651 = vmatmul.bf16.gmra.mxu0 %v485
  %v1652 = vpop.f32.mrf.mxu0
  %v1653 = vadd.f32 %v1564, %v1652
  %v1654 = vpop.f32.mrf.mxu0
  %v1655 = vadd.f32 %v1566, %v1654
  %1656 = vmatmul.bf16.gmra.mxu0 %v487
  %v1657 = vpop.f32.mrf.mxu0
  %v1658 = vadd.f32 %v1569, %v1657
  %v1659 = vpop.f32.mrf.mxu0
  %v1660 = vadd.f32 %v1571, %v1659
  %1661 = vdwg.mxu0
  %v1662 = vsub.f32 %v1356, %v1583
  %v1663 = vsub.f32 %v1357, %v1585
  %v1664 = vsub.f32 %v1358, %v1588
  %v1665 = vsub.f32 %v1359, %v1590
  %v1666 = vsub.f32 %v1360, %v1593
  %v1667 = vsub.f32 %v1361, %v1595
  %v1668 = vsub.f32 %v1362, %v1598
  %v1669 = vsub.f32 %v1363, %v1600
  %v1670 = vsub.f32 %v1364, %v1603
  %v1671 = vsub.f32 %v1365, %v1605
  %v1672 = vsub.f32 %v1366, %v1608
  %v1673 = vsub.f32 %v1367, %v1610
  %v1674 = vsub.f32 %v1368, %v1613
  %v1675 = vsub.f32 %v1369, %v1615
  %v1676 = vsub.f32 %v1370, %v1618
  %v1677 = vsub.f32 %v1371, %v1620
  %v1678 = vsub.f32 %v1372, %v1623
  %v1679 = vsub.f32 %v1373, %v1625
  %v1680 = vsub.f32 %v1374, %v1628
  %v1681 = vsub.f32 %v1375, %v1630
  %v1682 = vsub.f32 %v1376, %v1633
  %v1683 = vsub.f32 %v1377, %v1635
  %v1684 = vsub.f32 %v1378, %v1638
  %v1685 = vsub.f32 %v1379, %v1640
  %v1686 = vsub.f32 %v1380, %v1643
  %v1687 = vsub.f32 %v1381, %v1645
  %v1688 = vsub.f32 %v1382, %v1648
  %v1689 = vsub.f32 %v1383, %v1650
  %v1690 = vsub.f32 %v1384, %v1653
  %v1691 = vsub.f32 %v1385, %v1655
  %v1692 = vsub.f32 %v1386, %v1658
  %v1693 = vsub.f32 %v1387, %v1660
  %v1694 = vmul.f32 %v1662, 2.0
  %v1695 = vmul.f32 %v1663, 2.0
  %v1696 = vmul.f32 %v1664, 2.0
  %v1697 = vmul.f32 %v1665, 2.0
  %v1698 = vmul.f32 %v1666, 2.0
  %v1699 = vmul.f32 %v1667, 2.0
  %v1700 = vmul.f32 %v1668, 2.0
  %v1701 = vmul.f32 %v1669, 2.0
  %v1702 = vmul.f32 %v1670, 2.0
  %v1703 = vmul.f32 %v1671, 2.0
  %v1704 = vmul.f32 %v1672, 2.0
  %v1705 = vmul.f32 %v1673, 2.0
  %v1706 = vmul.f32 %v1674, 2.0
  %v1707 = vmul.f32 %v1675, 2.0
  %v1708 = vmul.f32 %v1676, 2.0
  %v1709 = vmul.f32 %v1677, 2.0
  %v1710 = vmul.f32 %v1678, 2.0
  %v1711 = vmul.f32 %v1679, 2.0
  %v1712 = vmul.f32 %v1680, 2.0
  %v1713 = vmul.f32 %v1681, 2.0
  %v1714 = vmul.f32 %v1682, 2.0
  %v1715 = vmul.f32 %v1683, 2.0
  %v1716 = vmul.f32 %v1684, 2.0
  %v1717 = vmul.f32 %v1685, 2.0
  %v1718 = vmul.f32 %v1686, 2.0
  %v1719 = vmul.f32 %v1687, 2.0
  %v1720 = vmul.f32 %v1688, 2.0
  %v1721 = vmul.f32 %v1689, 2.0
  %v1722 = vmul.f32 %v1690, 2.0
  %v1723 = vmul.f32 %v1691, 2.0
  %v1724 = vmul.f32 %v1692, 2.0
  %v1725 = vmul.f32 %v1693, 2.0
  %v1726 = vsub.f32 %v1694, %v890
  %v1727 = vsub.f32 %v1695, %v891
  %v1728 = vsub.f32 %v1696, %v892
  %v1729 = vsub.f32 %v1697, %v893
  %v1730 = vsub.f32 %v1698, %v894
  %v1731 = vsub.f32 %v1699, %v895
  %v1732 = vsub.f32 %v1700, %v896
  %v1733 = vsub.f32 %v1701, %v897
  %v1734 = vsub.f32 %v1702, %v898
  %v1735 = vsub.f32 %v1703, %v899
  %v1736 = vsub.f32 %v1704, %v900
  %v1737 = vsub.f32 %v1705, %v901
  %v1738 = vsub.f32 %v1706, %v902
  %v1739 = vsub.f32 %v1707, %v903
  %v1740 = vsub.f32 %v1708, %v904
  %v1741 = vsub.f32 %v1709, %v905
  %v1742 = vsub.f32 %v1710, %v906
  %v1743 = vsub.f32 %v1711, %v907
  %v1744 = vsub.f32 %v1712, %v908
  %v1745 = vsub.f32 %v1713, %v909
  %v1746 = vsub.f32 %v1714, %v910
  %v1747 = vsub.f32 %v1715, %v911
  %v1748 = vsub.f32 %v1716, %v912
  %v1749 = vsub.f32 %v1717, %v913
  %v1750 = vsub.f32 %v1718, %v914
  %v1751 = vsub.f32 %v1719, %v915
  %v1752 = vsub.f32 %v1720, %v916
  %v1753 = vsub.f32 %v1721, %v917
  %v1754 = vsub.f32 %v1722, %v918
  %v1755 = vsub.f32 %v1723, %v919
  %v1756 = vsub.f32 %v1724, %v920
  %v1757 = vsub.f32 %v1725, %v921
  %v1758 = vadd.f32 %v1292, %v1726
  %v1759 = vadd.f32 %v1293, %v1727
  %v1760 = vadd.f32 %v1294, %v1728
  %v1761 = vadd.f32 %v1295, %v1729
  %v1762 = vadd.f32 %v1296, %v1730
  %v1763 = vadd.f32 %v1297, %v1731
  %v1764 = vadd.f32 %v1298, %v1732
  %v1765 = vadd.f32 %v1299, %v1733
  %v1766 = vadd.f32 %v1300, %v1734
  %v1767 = vadd.f32 %v1301, %v1735
  %v1768 = vadd.f32 %v1302, %v1736
  %v1769 = vadd.f32 %v1303, %v1737
  %v1770 = vadd.f32 %v1304, %v1738
  %v1771 = vadd.f32 %v1305, %v1739
  %v1772 = vadd.f32 %v1306, %v1740
  %v1773 = vadd.f32 %v1307, %v1741
  %v1774 = vadd.f32 %v1308, %v1742
  %v1775 = vadd.f32 %v1309, %v1743
  %v1776 = vadd.f32 %v1310, %v1744
  %v1777 = vadd.f32 %v1311, %v1745
  %v1778 = vadd.f32 %v1312, %v1746
  %v1779 = vadd.f32 %v1313, %v1747
  %v1780 = vadd.f32 %v1314, %v1748
  %v1781 = vadd.f32 %v1315, %v1749
  %v1782 = vadd.f32 %v1316, %v1750
  %v1783 = vadd.f32 %v1317, %v1751
  %v1784 = vadd.f32 %v1318, %v1752
  %v1785 = vadd.f32 %v1319, %v1753
  %v1786 = vadd.f32 %v1320, %v1754
  %v1787 = vadd.f32 %v1321, %v1755
  %v1788 = vadd.f32 %v1322, %v1756
  %v1789 = vadd.f32 %v1323, %v1757
  %v1790 = vmax.f32 %v1758, 0.0
  %v1791 = vmax.f32 %v1759, 0.0
  %v1792 = vmax.f32 %v1760, 0.0
  %v1793 = vmax.f32 %v1761, 0.0
  %v1794 = vmax.f32 %v1762, 0.0
  %v1795 = vmax.f32 %v1763, 0.0
  %v1796 = vmax.f32 %v1764, 0.0
  %v1797 = vmax.f32 %v1765, 0.0
  %v1798 = vmax.f32 %v1766, 0.0
  %v1799 = vmax.f32 %v1767, 0.0
  %v1800 = vmax.f32 %v1768, 0.0
  %v1801 = vmax.f32 %v1769, 0.0
  %v1802 = vmax.f32 %v1770, 0.0
  %v1803 = vmax.f32 %v1771, 0.0
  %v1804 = vmax.f32 %v1772, 0.0
  %v1805 = vmax.f32 %v1773, 0.0
  %v1806 = vmax.f32 %v1774, 0.0
  %v1807 = vmax.f32 %v1775, 0.0
  %v1808 = vmax.f32 %v1776, 0.0
  %v1809 = vmax.f32 %v1777, 0.0
  %v1810 = vmax.f32 %v1778, 0.0
  %v1811 = vmax.f32 %v1779, 0.0
  %v1812 = vmax.f32 %v1780, 0.0
  %v1813 = vmax.f32 %v1781, 0.0
  %v1814 = vmax.f32 %v1782, 0.0
  %v1815 = vmax.f32 %v1783, 0.0
  %v1816 = vmax.f32 %v1784, 0.0
  %v1817 = vmax.f32 %v1785, 0.0
  %v1818 = vmax.f32 %v1786, 0.0
  %v1819 = vmax.f32 %v1787, 0.0
  %v1820 = vmax.f32 %v1788, 0.0
  %v1821 = vmax.f32 %v1789, 0.0
  %1822 = vst [vmem:[%s4] sm:$0xff] %v1790
  %1823 = vst [vmem:[%s4 + $0x8] sm:$0xff] %v1791
  %1824 = vst [vmem:[%s4 + $0x10] sm:$0xff] %v1792
  %1825 = vst [vmem:[%s4 + $0x18] sm:$0xff] %v1793
  %1826 = vst [vmem:[%s4 + $0x20] sm:$0xff] %v1794
  %1827 = vst [vmem:[%s4 + $0x28] sm:$0xff] %v1795
  %1828 = vst [vmem:[%s4 + $0x30] sm:$0xff] %v1796
  %1829 = vst [vmem:[%s4 + $0x38] sm:$0xff] %v1797
  %1830 = vst [vmem:[%s4 + $0x40] sm:$0xff] %v1798
  %1831 = vst [vmem:[%s4 + $0x48] sm:$0xff] %v1799
  %1832 = vst [vmem:[%s4 + $0x50] sm:$0xff] %v1800
  %1833 = vst [vmem:[%s4 + $0x58] sm:$0xff] %v1801
  %1834 = vst [vmem:[%s4 + $0x60] sm:$0xff] %v1802
  %1835 = vst [vmem:[%s4 + $0x68] sm:$0xff] %v1803
  %1836 = vst [vmem:[%s4 + $0x70] sm:$0xff] %v1804
  %1837 = vst [vmem:[%s4 + $0x78] sm:$0xff] %v1805
  %1838 = vst [vmem:[%s4 + $0x80] sm:$0xff] %v1806
  %1839 = vst [vmem:[%s4 + $0x88] sm:$0xff] %v1807
  %1840 = vst [vmem:[%s4 + $0x90] sm:$0xff] %v1808
  %1841 = vst [vmem:[%s4 + $0x98] sm:$0xff] %v1809
  %1842 = vst [vmem:[%s4 + $0xa0] sm:$0xff] %v1810
  %1843 = vst [vmem:[%s4 + $0xa8] sm:$0xff] %v1811
  %1844 = vst [vmem:[%s4 + $0xb0] sm:$0xff] %v1812
  %1845 = vst [vmem:[%s4 + $0xb8] sm:$0xff] %v1813
  %1846 = vst [vmem:[%s4 + $0xc0] sm:$0xff] %v1814
  %1847 = vst [vmem:[%s4 + $0xc8] sm:$0xff] %v1815
  %1848 = vst [vmem:[%s4 + $0xd0] sm:$0xff] %v1816
  %1849 = vst [vmem:[%s4 + $0xd8] sm:$0xff] %v1817
  %1850 = vst [vmem:[%s4 + $0xe0] sm:$0xff] %v1818
  %1851 = vst [vmem:[%s4 + $0xe8] sm:$0xff] %v1819
  %1852 = vst [vmem:[%s4 + $0xf0] sm:$0xff] %v1820
  %1853 = vst [vmem:[%s4 + $0xf8] sm:$0xff] %v1821
  // Predicated region
  $region18: #{chebyshev_forward.1} parent=0 // pred_check
    _
  $region19: #{chebyshev_forward.1} parent=0 // pred_check_branch
    %1855 = sbr.rel (0) target = $region21
  $region20: #{chebyshev_forward.1} parent=0 // pred_region
    _
  $region21: #{chebyshev_forward.1} parent=0 // pred_fallthru
    _
  // Predicated region
  $region22: #{chebyshev_forward.1} parent=0 // pred_check
    _
  $region23: #{chebyshev_forward.1} parent=0 // pred_check_branch
    %1857 = sbr.rel (0) target = $region25
  $region24: #{chebyshev_forward.1} parent=0 // pred_region
    _
  $region25: #{chebyshev_forward.1} parent=0 // pred_fallthru
    _

</llo_original>
